<compile_context>
chip_gen: v5e
topology: v5e:2x2
jax: 0.10.0
libtpu: 0.0.40
codegen_flags: <defaults>
</compile_context>

<pallas_src>
import functools

import jax
import jax.numpy as jnp
from jax.experimental import pallas as pl
from jax.experimental.pallas import tpu as pltpu

_LANE = 128


def _round_up(v, m):
    return (v + m - 1) // m * m


def _pad2(a, rows, cols):
    a = jnp.asarray(a, jnp.float32)
    return jnp.pad(a, ((0, rows - a.shape[0]), (0, cols - a.shape[1])))


def _default_vmem_limit():
    """Derive a scoped-VMEM budget from the actual chip (v7x: 64 MiB phys -> ~48 MiB,
    v5e/v6e: 128 MiB phys -> ~96 MiB). Conservative 64 MiB fallback if query fails."""
    try:
        info = pltpu.get_tpu_info()
        phys = int(getattr(info, "vmem_capacity_bytes", 64 * 1024 * 1024))
    except Exception:
        phys = 64 * 1024 * 1024
    return max(32 * 1024 * 1024, min(phys * 3 // 4, 110 * 1024 * 1024))


_VMEM_LIMIT = _default_vmem_limit()


# ----------------------------------------------------------------------------------
# Pass 1: support = X @ W   (row tiles x d_in contraction tiles, f32 VMEM accumulator)
# X and W arrive bf16 from the wrapper; output stored bf16.
# ----------------------------------------------------------------------------------
def _support_kernel(x_ref, w_ref, o_ref, acc_ref):
    k = pl.program_id(1)

    @pl.when(k == 0)
    def _():
        acc_ref[...] = jnp.zeros_like(acc_ref)

    acc_ref[...] += jnp.dot(x_ref[...], w_ref[...], preferred_element_type=jnp.float32)

    @pl.when(k == pl.num_programs(1) - 1)
    def _():
        o_ref[...] = acc_ref[...].astype(o_ref.dtype)


def _support(x_p, w_p, *, tm, tkc, vmem_limit):
    n_rows, d_in_p = x_p.shape
    d_o_p = w_p.shape[1]
    return pl.pallas_call(
        _support_kernel,
        out_shape=jax.ShapeDtypeStruct((n_rows, d_o_p), jnp.bfloat16),
        grid_spec=pltpu.PrefetchScalarGridSpec(
            num_scalar_prefetch=0,
            grid=(n_rows // tm, d_in_p // tkc),
            in_specs=[
                pl.BlockSpec((tm, tkc), lambda i, k: (i, k)),
                pl.BlockSpec((tkc, d_o_p), lambda i, k: (k, 0)),
            ],
            out_specs=pl.BlockSpec((tm, d_o_p), lambda i, k: (i, 0)),
            scratch_shapes=[pltpu.VMEM((tm, d_o_p), jnp.float32)],
        ),
        compiler_params=pltpu.CompilerParams(
            dimension_semantics=("parallel", "arbitrary"),
            vmem_limit_bytes=vmem_limit),
    )(x_p, w_p)


# ----------------------------------------------------------------------------------
# Pass 2/3: out = LReLU(GN(adj @ support + b)) @ W_next + b_next
#   grid = (row tiles i [parallel], adj-contraction tiles k [arbitrary]);
#   f32 VMEM accumulator carried across k; GN/LReLU/next-matmul fused into finalize.
#   When `s_resident`, the whole bf16 support matrix stays in VMEM (constant-index
#   block) and is sliced with pl.ds per K step (no re-streaming per row tile).
# ----------------------------------------------------------------------------------
def _propagate_kernel(d_real, tk, s_resident,
                      adj_ref, s_ref, b_ref, gamma_ref, beta_ref, wn_ref, bn_ref,
                      o_ref, acc_ref):
    k = pl.program_id(1)

    @pl.when(k == 0)
    def _():
        acc_ref[...] = jnp.zeros_like(acc_ref)

    if s_resident:
        s_blk = s_ref[pl.ds(pl.multiple_of(k * tk, tk), tk), :]
    else:
        s_blk = s_ref[...]
    # adj and support are bf16; accumulate in f32.
    acc_ref[...] += jnp.dot(adj_ref[...], s_blk, preferred_element_type=jnp.float32)

    @pl.when(k == pl.num_programs(1) - 1)
    def _():
        h = acc_ref[...] + b_ref[...]                       # f32
        # GroupNorm(num_groups=1) over the d_real real channels. Padded channels of h
        # are exactly zero (zero-padded weights/biases); the mask keeps the two-pass
        # variance exact over the real channels only.
        col = jax.lax.broadcasted_iota(jnp.int32, h.shape, 1)
        mask = col < d_real
        inv_d = jnp.float32(1.0 / d_real)
        mean = jnp.sum(h, axis=-1, keepdims=True) * inv_d
        centered = jnp.where(mask, h - mean, 0.0)
        var = jnp.sum(centered * centered, axis=-1, keepdims=True) * inv_d
        h_hat = centered * jax.lax.rsqrt(var + 1e-5)
        h_aff = h_hat * gamma_ref[...] + beta_ref[...]      # padded gamma/beta = 0
        h_act = jnp.where(h_aff > 0, h_aff, 0.01 * h_aff)   # LeakyReLU(0.01)
        out = jnp.dot(h_act.astype(jnp.bfloat16), wn_ref[...],
                      preferred_element_type=jnp.float32) + bn_ref[...]
        o_ref[...] = out.astype(o_ref.dtype)


def _propagate(adj_p, s_p, b_p, gamma_p, beta_p, wn_p, bn_p, d_real, *,
               tm, tk, s_resident, out_dtype, vmem_limit):
    r_pad, k_pad = adj_p.shape
    d_h_p = s_p.shape[1]
    d_n_p = wn_p.shape[1]
    kernel = functools.partial(_propagate_kernel, int(d_real), int(tk), bool(s_resident))
    if s_resident:
        # Whole support matrix kept resident in VMEM (block index never changes).
        s_spec = pl.BlockSpec((k_pad, d_h_p), lambda i, k: (0, 0))
    else:
        # Fallback for very large N: stream the (tk, d_h) block per K step.
        s_spec = pl.BlockSpec((tk, d_h_p), lambda i, k: (k, 0))
    return pl.pallas_call(
        kernel,
        out_shape=jax.ShapeDtypeStruct((r_pad, d_n_p), out_dtype),
        grid_spec=pltpu.PrefetchScalarGridSpec(
            num_scalar_prefetch=0,
            grid=(r_pad // tm, k_pad // tk),
            in_specs=[
                pl.BlockSpec((tm, tk), lambda i, k: (i, k)),        # adj (bf16)
                s_spec,                                             # support (bf16)
                pl.BlockSpec((1, d_h_p), lambda i, k: (0, 0)),      # GCN bias (f32)
                pl.BlockSpec((1, d_h_p), lambda i, k: (0, 0)),      # gamma (f32)
                pl.BlockSpec((1, d_h_p), lambda i, k: (0, 0)),      # beta (f32)
                pl.BlockSpec((d_h_p, d_n_p), lambda i, k: (0, 0)),  # next weight (bf16)
                pl.BlockSpec((1, d_n_p), lambda i, k: (0, 0)),      # next bias (f32)
            ],
            out_specs=pl.BlockSpec((tm, d_n_p), lambda i, k: (i, 0)),
            scratch_shapes=[pltpu.VMEM((tm, d_h_p), jnp.float32)],
        ),
        compiler_params=pltpu.CompilerParams(
            dimension_semantics=("parallel", "arbitrary"),
            vmem_limit_bytes=vmem_limit),
    )(adj_p, s_p, b_p, gamma_p, beta_p, wn_p, bn_p)


@jax.jit
def gcn_layer(x, adj, params):
    """x: (N, C, H, W), adj: (N, N). params = (w1,b1,w2,b2,gamma,beta,w3,b3)."""
    w1, b1, w2, b2, gamma, beta, w3, b3 = params
    n = x.shape[0]
    x2 = x.reshape(n, -1)
    d_in, d_hidden, d_out = x2.shape[1], w1.shape[1], w3.shape[1]

    vmem_limit = _VMEM_LIMIT

    # --- node-dimension tiles (tm rows x tk adjacency columns) ---
    if n <= 512:
        tm = 128
    elif n <= 2048:
        tm = 256
    else:
        tm = 512
    # v7x megacore: keep >= 2 row tiles on the parallel axis when possible.
    while tm > 128 and _round_up(n, tm) < 2 * tm:
        tm //= 2
    r_pad = _round_up(n, tm)                 # adjacency rows / output rows
    tk = min(r_pad, 2048)                    # multiple of tm; small graphs -> 1 K step
    k_pad = _round_up(r_pad, tk)             # adjacency columns / support rows

    # --- lane-dense feature widths (multiples of 128) ---
    d_in_p = _round_up(d_in, _LANE)
    if d_in_p > 4096:                        # K-tile pass 1 only when d_in is wide
        tkc = 2048
        d_in_p = _round_up(d_in_p, tkc)
    else:
        tkc = d_in_p
    d_h_p = _round_up(d_hidden, _LANE)
    d_out_p = _round_up(d_out, _LANE)

    # Keep the bf16 support matrix resident in VMEM if it (double-buffered) fits
    # comfortably inside the budget; otherwise stream it per K block.
    s_resident = (2 * k_pad * d_h_p * 2) <= (vmem_limit // 3)

    # --- pad / cast operands (adj cast to bf16 BEFORE padding: no f32 N^2 temp) ---
    adj_p = jnp.pad(jnp.asarray(adj).astype(jnp.bfloat16),
                    ((0, r_pad - n), (0, k_pad - n)))
    x_p = jnp.pad(x2.astype(jnp.bfloat16),
                  ((0, k_pad - n), (0, d_in_p - d_in)))
    w1_p = _pad2(w1, d_in_p, d_h_p).astype(jnp.bfloat16)
    w2_p = _pad2(w2, d_h_p, d_h_p).astype(jnp.bfloat16)
    w3_p = _pad2(w3, d_h_p, d_out_p).astype(jnp.bfloat16)
    b1_p = _pad2(jnp.asarray(b1).reshape(1, -1), 1, d_h_p)
    b2_p = _pad2(jnp.asarray(b2).reshape(1, -1), 1, d_h_p)
    b3_p = _pad2(jnp.asarray(b3).reshape(1, -1), 1, d_out_p)
    gamma_p = _pad2(jnp.asarray(gamma).reshape(1, -1), 1, d_h_p)
    beta_p = _pad2(jnp.asarray(beta).reshape(1, -1), 1, d_h_p)
    zero_h = jnp.zeros((1, d_h_p), jnp.float32)

    # Layer 1: support, then adj-propagate + GN + LReLU fused with @W2 (d1 = identity).
    s1 = _support(x_p, w1_p, tm=tm, tkc=tkc, vmem_limit=vmem_limit)      # (k_pad, d_h)
    s2 = _propagate(adj_p, s1, b1_p, gamma_p, beta_p, w2_p, zero_h, d_hidden,
                    tm=tm, tk=tk, s_resident=s_resident,
                    out_dtype=jnp.bfloat16, vmem_limit=vmem_limit)       # (r_pad, d_h)
    if k_pad > r_pad:
        s2 = jnp.pad(s2, ((0, k_pad - r_pad), (0, 0)))
    # Layer 2 + fc3 fused into the finalize step (d2 = identity).
    out = _propagate(adj_p, s2, b2_p, gamma_p, beta_p, w3_p, b3_p, d_hidden,
                     tm=tm, tk=tk, s_resident=s_resident,
                     out_dtype=jnp.float32, vmem_limit=vmem_limit)       # (r_pad, d_out)
    return out[:n, :d_out]


def gcn_layer_ref(x, adj, params):
    """Pure-JAX f32 reference for correctness check."""
    w1, b1, w2, b2, gamma, beta, w3, b3 = params
    h = x.reshape(x.shape[0], -1)

    def gn_lrelu(h):
        mean = jnp.mean(h, axis=-1, keepdims=True)
        var = jnp.mean((h - mean) ** 2, axis=-1, keepdims=True)
        hh = (h - mean) / jnp.sqrt(var + 1e-5) * gamma + beta
        return jnp.where(hh > 0, hh, 0.01 * hh)

    h = adj @ (h @ w1) + b1
    h = gn_lrelu(h)
    h = adj @ (h @ w2) + b2
    h = gn_lrelu(h)
    return h @ w3 + b3


if __name__ == "__main__":
    # Small shapes consistent with the module: flatten(x,1) -> (N, D_in)
    N, C, H, W = 16, 4, 8, 8          # D_in = 256
    D_in, D_hidden, D_out = C * H * W, 64, 32

    key = jax.random.PRNGKey(0)
    keys = jax.random.split(key, 10)

    x = jax.random.normal(keys[0], (N, C, H, W), dtype=jnp.float32)
    adj = jax.random.uniform(keys[1], (N, N), dtype=jnp.float32)
    adj = 0.5 * (adj + adj.T)         # symmetric dense adjacency

    # Deterministic parameter init (shapes from GraphConvolution / Linear / GroupNorm).
    w1 = jax.random.normal(keys[2], (D_in, D_hidden), dtype=jnp.float32) * 0.1
    b1 = jax.random.normal(keys[3], (1, D_hidden), dtype=jnp.float32) * 0.1
    w2 = jax.random.normal(keys[4], (D_hidden, D_hidden), dtype=jnp.float32) * 0.1
    b2 = jax.random.normal(keys[5], (1, D_hidden), dtype=jnp.float32) * 0.1
    gamma = jnp.ones((1, D_hidden), dtype=jnp.float32) + \
        0.05 * jax.random.normal(keys[6], (1, D_hidden), dtype=jnp.float32)
    beta = 0.05 * jax.random.normal(keys[7], (1, D_hidden), dtype=jnp.float32)
    w3 = jax.random.normal(keys[8], (D_hidden, D_out), dtype=jnp.float32) * 0.1
    b3 = jax.random.normal(keys[9], (1, D_out), dtype=jnp.float32) * 0.1

    params = (w1, b1, w2, b2, gamma, beta, w3, b3)

    out = gcn_layer(x, adj, params)
    out = jax.block_until_ready(out)

    ref = gcn_layer_ref(x, adj, params)
    assert out.shape == (N, D_out)
    # bf16 MXU operands (f32 accumulation) vs f32 reference -> relaxed tolerance.
    assert jnp.allclose(out, ref, atol=5e-2, rtol=5e-2), (
        "mismatch vs reference, max abs err = "
        f"{float(jnp.max(jnp.abs(out - ref)))}")

    print("KERNEL_OK")
</pallas_src>

<mosaic_0001>
module attributes {stable_mosaic.version = 11 : i64} {
  func.func @_support_kernel(%arg0: i32, %arg1: i32, %arg2: memref<128x256xbf16, #tpu.memory_space<vmem>>, %arg3: memref<256x128xbf16, #tpu.memory_space<vmem>>, %arg4: memref<128x128xbf16, #tpu.memory_space<vmem>>, %arg5: memref<128x128xf32, #tpu.memory_space<vmem>>) attributes {dimension_semantics = [#tpu.dimension_semantics<parallel>, #tpu.dimension_semantics<arbitrary>], iteration_bounds = array<i64: 1, 1>, scalar_prefetch = 0 : i64, scratch_operands = 1 : i64, tpu.core_type = #tpu.core_type<tc>, window_params = [{transform_indices = @transform_0, window_bounds = array<i64: 128, 256>}, {transform_indices = @transform_1, window_bounds = array<i64: 256, 128>}, {transform_indices = @transform_2, window_bounds = array<i64: 128, 128>}]} {
    %c0_i32 = arith.constant 0 : i32
    %0 = arith.cmpi eq, %arg1, %c0_i32 : i32
    %1 = arith.extui %0 : i1 to i32
    %c0_i32_0 = arith.constant 0 : i32
    %2 = arith.cmpi ne, %1, %c0_i32_0 : i32
    scf.if %2 {
      %cst_10 = arith.constant 0.000000e+00 : f32
      %12 = vector.broadcast %cst_10 : f32 to vector<128x128xf32>
      %c0_11 = arith.constant 0 : index
      %c0_12 = arith.constant 0 : index
      %13 = vector.load %arg5[%c0_11, %c0_12] : memref<128x128xf32, #tpu.memory_space<vmem>>, vector<128x128xf32>
      tpu.vector_store %arg5[%c0_11, %c0_12], %12 {strides = array<i32>} : memref<128x128xf32, #tpu.memory_space<vmem>>, vector<128x128xf32>,
    } else {
    }
    %c0 = arith.constant 0 : index
    %c0_1 = arith.constant 0 : index
    %3 = vector.load %arg5[%c0, %c0_1] : memref<128x128xf32, #tpu.memory_space<vmem>>, vector<128x128xf32>
    %c0_2 = arith.constant 0 : index
    %c0_3 = arith.constant 0 : index
    %4 = vector.load %arg2[%c0_2, %c0_3] : memref<128x256xbf16, #tpu.memory_space<vmem>>, vector<128x256xbf16>
    %c0_4 = arith.constant 0 : index
    %c0_5 = arith.constant 0 : index
    %5 = vector.load %arg3[%c0_4, %c0_5] : memref<256x128xbf16, #tpu.memory_space<vmem>>, vector<256x128xbf16>
    %cst = arith.constant dense<0.000000e+00> : vector<128x128xf32>
    %6 = tpu.matmul %4, %5, %cst {dimension_numbers = #tpu.dot_dimension_numbers<[1], [0], [0], [1], [0, 0, 1, 1], [], []>} : vector<128x256xbf16>, vector<256x128xbf16>, vector<128x128xf32> -> vector<128x128xf32>
    %7 = arith.addf %3, %6 : vector<128x128xf32>
    %c0_6 = arith.constant 0 : index
    %c0_7 = arith.constant 0 : index
    %8 = vector.load %arg5[%c0_6, %c0_7] : memref<128x128xf32, #tpu.memory_space<vmem>>, vector<128x128xf32>
    tpu.vector_store %arg5[%c0_6, %c0_7], %7 {strides = array<i32>} : memref<128x128xf32, #tpu.memory_space<vmem>>, vector<128x128xf32>,
    %c0_i32_8 = arith.constant 0 : i32
    %9 = arith.cmpi eq, %arg1, %c0_i32_8 : i32
    %10 = arith.extui %9 : i1 to i32
    %c0_i32_9 = arith.constant 0 : i32
    %11 = arith.cmpi ne, %10, %c0_i32_9 : i32
    scf.if %11 {
      %c0_10 = arith.constant 0 : index
      %c0_11 = arith.constant 0 : index
      %12 = vector.load %arg5[%c0_10, %c0_11] : memref<128x128xf32, #tpu.memory_space<vmem>>, vector<128x128xf32>
      %13 = arith.truncf %12 : vector<128x128xf32> to vector<128x128xbf16>
      %c0_12 = arith.constant 0 : index
      %c0_13 = arith.constant 0 : index
      %14 = vector.load %arg4[%c0_12, %c0_13] : memref<128x128xbf16, #tpu.memory_space<vmem>>, vector<128x128xbf16>
      tpu.vector_store %arg4[%c0_12, %c0_13], %13 {strides = array<i32>} : memref<128x128xbf16, #tpu.memory_space<vmem>>, vector<128x128xbf16>,
    } else {
    }
    return
  }
  func.func @transform_0(%arg0: i32, %arg1: i32) -> (i32, i32) {
    %c0_i32 = arith.constant 0 : i32
    return %arg0, %arg1 : i32, i32
  }
  func.func @transform_1(%arg0: i32, %arg1: i32) -> (i32, i32) {
    %c0_i32 = arith.constant 0 : i32
    %c0_i32_0 = arith.constant 0 : i32
    return %arg1, %c0_i32 : i32, i32
  }
  func.func @transform_2(%arg0: i32, %arg1: i32) -> (i32, i32) {
    %c0_i32 = arith.constant 0 : i32
    %c0_i32_0 = arith.constant 0 : i32
    return %arg0, %c0_i32 : i32, i32
  }
}

module attributes {stable_mosaic.version = 11 : i64} {
  func.func @_propagate_kernel(%arg0: i32, %arg1: i32, %arg2: memref<128x128xbf16, #tpu.memory_space<vmem>>, %arg3: memref<128x128xbf16, #tpu.memory_space<vmem>>, %arg4: memref<1x128xf32, #tpu.memory_space<vmem>>, %arg5: memref<1x128xf32, #tpu.memory_space<vmem>>, %arg6: memref<1x128xf32, #tpu.memory_space<vmem>>, %arg7: memref<128x128xbf16, #tpu.memory_space<vmem>>, %arg8: memref<1x128xf32, #tpu.memory_space<vmem>>, %arg9: memref<128x128xbf16, #tpu.memory_space<vmem>>, %arg10: memref<128x128xf32, #tpu.memory_space<vmem>>) attributes {dimension_semantics = [#tpu.dimension_semantics<parallel>, #tpu.dimension_semantics<arbitrary>], iteration_bounds = array<i64: 1, 1>, scalar_prefetch = 0 : i64, scratch_operands = 1 : i64, tpu.core_type = #tpu.core_type<tc>, window_params = [{transform_indices = @transform_0, window_bounds = array<i64: 128, 128>}, {pipeline_mode = #tpu.pipeline_mode<synchronous>, transform_indices = @transform_1, window_bounds = array<i64: 128, 128>}, {pipeline_mode = #tpu.pipeline_mode<synchronous>, transform_indices = @transform_2, window_bounds = array<i64: 1, 128>}, {pipeline_mode = #tpu.pipeline_mode<synchronous>, transform_indices = @transform_3, window_bounds = array<i64: 1, 128>}, {pipeline_mode = #tpu.pipeline_mode<synchronous>, transform_indices = @transform_4, window_bounds = array<i64: 1, 128>}, {pipeline_mode = #tpu.pipeline_mode<synchronous>, transform_indices = @transform_5, window_bounds = array<i64: 128, 128>}, {pipeline_mode = #tpu.pipeline_mode<synchronous>, transform_indices = @transform_6, window_bounds = array<i64: 1, 128>}, {transform_indices = @transform_7, window_bounds = array<i64: 128, 128>}]} {
    %c0_i32 = arith.constant 0 : i32
    %0 = arith.cmpi eq, %arg1, %c0_i32 : i32
    %1 = arith.extui %0 : i1 to i32
    %c0_i32_0 = arith.constant 0 : i32
    %2 = arith.cmpi ne, %1, %c0_i32_0 : i32
    scf.if %2 {
      %cst_9 = arith.constant 0.000000e+00 : f32
      %15 = vector.broadcast %cst_9 : f32 to vector<128x128xf32>
      %c0_10 = arith.constant 0 : index
      %c0_11 = arith.constant 0 : index
      %16 = vector.load %arg10[%c0_10, %c0_11] : memref<128x128xf32, #tpu.memory_space<vmem>>, vector<128x128xf32>
      tpu.vector_store %arg10[%c0_10, %c0_11], %15 {strides = array<i32>} : memref<128x128xf32, #tpu.memory_space<vmem>>, vector<128x128xf32>,
    } else {
    }
    %c128_i32 = arith.constant 128 : i32
    %3 = arith.muli %arg1, %c128_i32 : i32
    %4 = tpu.assume_multiple %3, 128 : i32
    %5 = arith.index_cast %4 : i32 to index
    %c0 = arith.constant 0 : index
    %6 = vector.load %arg3[%5, %c0] : memref<128x128xbf16, #tpu.memory_space<vmem>>, vector<128x128xbf16>
    %c0_1 = arith.constant 0 : index
    %c0_2 = arith.constant 0 : index
    %7 = vector.load %arg10[%c0_1, %c0_2] : memref<128x128xf32, #tpu.memory_space<vmem>>, vector<128x128xf32>
    %c0_3 = arith.constant 0 : index
    %c0_4 = arith.constant 0 : index
    %8 = vector.load %arg2[%c0_3, %c0_4] : memref<128x128xbf16, #tpu.memory_space<vmem>>, vector<128x128xbf16>
    %cst = arith.constant dense<0.000000e+00> : vector<128x128xf32>
    %9 = tpu.matmul %8, %6, %cst {dimension_numbers = #tpu.dot_dimension_numbers<[1], [0], [0], [1], [0, 0, 1, 1], [], []>} : vector<128x128xbf16>, vector<128x128xbf16>, vector<128x128xf32> -> vector<128x128xf32>
    %10 = arith.addf %7, %9 : vector<128x128xf32>
    %c0_5 = arith.constant 0 : index
    %c0_6 = arith.constant 0 : index
    %11 = vector.load %arg10[%c0_5, %c0_6] : memref<128x128xf32, #tpu.memory_space<vmem>>, vector<128x128xf32>
    tpu.vector_store %arg10[%c0_5, %c0_6], %10 {strides = array<i32>} : memref<128x128xf32, #tpu.memory_space<vmem>>, vector<128x128xf32>,
    %c0_i32_7 = arith.constant 0 : i32
    %12 = arith.cmpi eq, %arg1, %c0_i32_7 : i32
    %13 = arith.extui %12 : i1 to i32
    %c0_i32_8 = arith.constant 0 : i32
    %14 = arith.cmpi ne, %13, %c0_i32_8 : i32
    scf.if %14 {
      %c0_9 = arith.constant 0 : index
      %c0_10 = arith.constant 0 : index
      %15 = vector.load %arg10[%c0_9, %c0_10] : memref<128x128xf32, #tpu.memory_space<vmem>>, vector<128x128xf32>
      %c0_11 = arith.constant 0 : index
      %c0_12 = arith.constant 0 : index
      %16 = vector.load %arg4[%c0_11, %c0_12] : memref<1x128xf32, #tpu.memory_space<vmem>>, vector<1x128xf32>
      %17 = vector.broadcast %16 : vector<1x128xf32> to vector<128x128xf32>
      %18 = arith.addf %15, %17 : vector<128x128xf32>
      %19 = tpu.iota {dimensions = array<i32: 1>} : vector<128x128xi32>
      %c64_i32 = arith.constant 64 : i32
      %20 = vector.broadcast %c64_i32 : i32 to vector<128x128xi32>
      %21 = arith.cmpi slt, %19, %20 : vector<128x128xi32>
      %cst_13 = arith.constant dense<0.000000e+00> : vector<128xf32>
      %22 = vector.multi_reduction <add>, %18, %cst_13 [1] : vector<128x128xf32> to vector<128xf32>
      %23 = vector.shape_cast %22 : vector<128xf32> to vector<128x1xf32>
      %cst_14 = arith.constant 1.562500e-02 : f32
      %24 = vector.broadcast %cst_14 : f32 to vector<128x1xf32>
      %25 = arith.mulf %23, %24 : vector<128x1xf32>
      %26 = vector.broadcast %25 : vector<128x1xf32> to vector<128x128xf32>
      %27 = arith.subf %18, %26 : vector<128x128xf32>
      %cst_15 = arith.constant 0.000000e+00 : f32
      %28 = vector.broadcast %cst_15 : f32 to vector<128x128xf32>
      %29 = arith.select %21, %27, %28 : vector<128x128xi1>, vector<128x128xf32>
      %30 = arith.mulf %29, %29 : vector<128x128xf32>
      %cst_16 = arith.constant dense<0.000000e+00> : vector<128xf32>
      %31 = vector.multi_reduction <add>, %30, %cst_16 [1] : vector<128x128xf32> to vector<128xf32>
      %32 = vector.shape_cast %31 : vector<128xf32> to vector<128x1xf32>
      %cst_17 = arith.constant 1.562500e-02 : f32
      %33 = vector.broadcast %cst_17 : f32 to vector<128x1xf32>
      %34 = arith.mulf %32, %33 : vector<128x1xf32>
      %cst_18 = arith.constant 9.99999974E-6 : f32
      %35 = vector.broadcast %cst_18 : f32 to vector<128x1xf32>
      %36 = arith.addf %34, %35 : vector<128x1xf32>
      %37 = math.rsqrt %36 : vector<128x1xf32>
      %38 = vector.broadcast %37 : vector<128x1xf32> to vector<128x128xf32>
      %39 = arith.mulf %29, %38 : vector<128x128xf32>
      %c0_19 = arith.constant 0 : index
      %c0_20 = arith.constant 0 : index
      %40 = vector.load %arg5[%c0_19, %c0_20] : memref<1x128xf32, #tpu.memory_space<vmem>>, vector<1x128xf32>
      %41 = vector.broadcast %40 : vector<1x128xf32> to vector<128x128xf32>
      %42 = arith.mulf %39, %41 : vector<128x128xf32>
      %c0_21 = arith.constant 0 : index
      %c0_22 = arith.constant 0 : index
      %43 = vector.load %arg6[%c0_21, %c0_22] : memref<1x128xf32, #tpu.memory_space<vmem>>, vector<1x128xf32>
      %44 = vector.broadcast %43 : vector<1x128xf32> to vector<128x128xf32>
      %45 = arith.addf %42, %44 : vector<128x128xf32>
      %cst_23 = arith.constant 0.000000e+00 : f32
      %46 = vector.broadcast %cst_23 : f32 to vector<128x128xf32>
      %47 = arith.cmpf ogt, %45, %46 : vector<128x128xf32>
      %cst_24 = arith.constant 0.00999999977 : f32
      %48 = vector.broadcast %cst_24 : f32 to vector<128x128xf32>
      %49 = arith.mulf %48, %45 : vector<128x128xf32>
      %50 = arith.select %47, %45, %49 : vector<128x128xi1>, vector<128x128xf32>
      %51 = arith.truncf %50 : vector<128x128xf32> to vector<128x128xbf16>
      %c0_25 = arith.constant 0 : index
      %c0_26 = arith.constant 0 : index
      %52 = vector.load %arg7[%c0_25, %c0_26] : memref<128x128xbf16, #tpu.memory_space<vmem>>, vector<128x128xbf16>
      %cst_27 = arith.constant dense<0.000000e+00> : vector<128x128xf32>
      %53 = tpu.matmul %51, %52, %cst_27 {dimension_numbers = #tpu.dot_dimension_numbers<[1], [0], [0], [1], [0, 0, 1, 1], [], []>} : vector<128x128xbf16>, vector<128x128xbf16>, vector<128x128xf32> -> vector<128x128xf32>
      %c0_28 = arith.constant 0 : index
      %c0_29 = arith.constant 0 : index
      %54 = vector.load %arg8[%c0_28, %c0_29] : memref<1x128xf32, #tpu.memory_space<vmem>>, vector<1x128xf32>
      %55 = vector.broadcast %54 : vector<1x128xf32> to vector<128x128xf32>
      %56 = arith.addf %53, %55 : vector<128x128xf32>
      %57 = arith.truncf %56 : vector<128x128xf32> to vector<128x128xbf16>
      %c0_30 = arith.constant 0 : index
      %c0_31 = arith.constant 0 : index
      %58 = vector.load %arg9[%c0_30, %c0_31] : memref<128x128xbf16, #tpu.memory_space<vmem>>, vector<128x128xbf16>
      tpu.vector_store %arg9[%c0_30, %c0_31], %57 {strides = array<i32>} : memref<128x128xbf16, #tpu.memory_space<vmem>>, vector<128x128xbf16>,
    } else {
    }
    return
  }
  func.func @transform_0(%arg0: i32, %arg1: i32) -> (i32, i32) {
    %c0_i32 = arith.constant 0 : i32
    return %arg0, %arg1 : i32, i32
  }
  func.func @transform_1(%arg0: i32, %arg1: i32) -> (i32, i32) {
    %c0_i32 = arith.constant 0 : i32
    %c0_i32_0 = arith.constant 0 : i32
    %c0_i32_1 = arith.constant 0 : i32
    return %c0_i32, %c0_i32_0 : i32, i32
  }
  func.func @transform_2(%arg0: i32, %arg1: i32) -> (i32, i32) {
    %c0_i32 = arith.constant 0 : i32
    %c0_i32_0 = arith.constant 0 : i32
    %c0_i32_1 = arith.constant 0 : i32
    return %c0_i32, %c0_i32_0 : i32, i32
  }
  func.func @transform_3(%arg0: i32, %arg1: i32) -> (i32, i32) {
    %c0_i32 = arith.constant 0 : i32
    %c0_i32_0 = arith.constant 0 : i32
    %c0_i32_1 = arith.constant 0 : i32
    return %c0_i32, %c0_i32_0 : i32, i32
  }
  func.func @transform_4(%arg0: i32, %arg1: i32) -> (i32, i32) {
    %c0_i32 = arith.constant 0 : i32
    %c0_i32_0 = arith.constant 0 : i32
    %c0_i32_1 = arith.constant 0 : i32
    return %c0_i32, %c0_i32_0 : i32, i32
  }
  func.func @transform_5(%arg0: i32, %arg1: i32) -> (i32, i32) {
    %c0_i32 = arith.constant 0 : i32
    %c0_i32_0 = arith.constant 0 : i32
    %c0_i32_1 = arith.constant 0 : i32
    return %c0_i32, %c0_i32_0 : i32, i32
  }
  func.func @transform_6(%arg0: i32, %arg1: i32) -> (i32, i32) {
    %c0_i32 = arith.constant 0 : i32
    %c0_i32_0 = arith.constant 0 : i32
    %c0_i32_1 = arith.constant 0 : i32
    return %c0_i32, %c0_i32_0 : i32, i32
  }
  func.func @transform_7(%arg0: i32, %arg1: i32) -> (i32, i32) {
    %c0_i32 = arith.constant 0 : i32
    %c0_i32_0 = arith.constant 0 : i32
    return %arg0, %c0_i32 : i32, i32
  }
}

module attributes {stable_mosaic.version = 11 : i64} {
  func.func @_propagate_kernel(%arg0: i32, %arg1: i32, %arg2: memref<128x128xbf16, #tpu.memory_space<vmem>>, %arg3: memref<128x128xbf16, #tpu.memory_space<vmem>>, %arg4: memref<1x128xf32, #tpu.memory_space<vmem>>, %arg5: memref<1x128xf32, #tpu.memory_space<vmem>>, %arg6: memref<1x128xf32, #tpu.memory_space<vmem>>, %arg7: memref<128x128xbf16, #tpu.memory_space<vmem>>, %arg8: memref<1x128xf32, #tpu.memory_space<vmem>>, %arg9: memref<128x128xf32, #tpu.memory_space<vmem>>, %arg10: memref<128x128xf32, #tpu.memory_space<vmem>>) attributes {dimension_semantics = [#tpu.dimension_semantics<parallel>, #tpu.dimension_semantics<arbitrary>], iteration_bounds = array<i64: 1, 1>, scalar_prefetch = 0 : i64, scratch_operands = 1 : i64, tpu.core_type = #tpu.core_type<tc>, window_params = [{transform_indices = @transform_0, window_bounds = array<i64: 128, 128>}, {pipeline_mode = #tpu.pipeline_mode<synchronous>, transform_indices = @transform_1, window_bounds = array<i64: 128, 128>}, {pipeline_mode = #tpu.pipeline_mode<synchronous>, transform_indices = @transform_2, window_bounds = array<i64: 1, 128>}, {pipeline_mode = #tpu.pipeline_mode<synchronous>, transform_indices = @transform_3, window_bounds = array<i64: 1, 128>}, {pipeline_mode = #tpu.pipeline_mode<synchronous>, transform_indices = @transform_4, window_bounds = array<i64: 1, 128>}, {pipeline_mode = #tpu.pipeline_mode<synchronous>, transform_indices = @transform_5, window_bounds = array<i64: 128, 128>}, {pipeline_mode = #tpu.pipeline_mode<synchronous>, transform_indices = @transform_6, window_bounds = array<i64: 1, 128>}, {transform_indices = @transform_7, window_bounds = array<i64: 128, 128>}]} {
    %c0_i32 = arith.constant 0 : i32
    %0 = arith.cmpi eq, %arg1, %c0_i32 : i32
    %1 = arith.extui %0 : i1 to i32
    %c0_i32_0 = arith.constant 0 : i32
    %2 = arith.cmpi ne, %1, %c0_i32_0 : i32
    scf.if %2 {
      %cst_9 = arith.constant 0.000000e+00 : f32
      %15 = vector.broadcast %cst_9 : f32 to vector<128x128xf32>
      %c0_10 = arith.constant 0 : index
      %c0_11 = arith.constant 0 : index
      %16 = vector.load %arg10[%c0_10, %c0_11] : memref<128x128xf32, #tpu.memory_space<vmem>>, vector<128x128xf32>
      tpu.vector_store %arg10[%c0_10, %c0_11], %15 {strides = array<i32>} : memref<128x128xf32, #tpu.memory_space<vmem>>, vector<128x128xf32>,
    } else {
    }
    %c128_i32 = arith.constant 128 : i32
    %3 = arith.muli %arg1, %c128_i32 : i32
    %4 = tpu.assume_multiple %3, 128 : i32
    %5 = arith.index_cast %4 : i32 to index
    %c0 = arith.constant 0 : index
    %6 = vector.load %arg3[%5, %c0] : memref<128x128xbf16, #tpu.memory_space<vmem>>, vector<128x128xbf16>
    %c0_1 = arith.constant 0 : index
    %c0_2 = arith.constant 0 : index
    %7 = vector.load %arg10[%c0_1, %c0_2] : memref<128x128xf32, #tpu.memory_space<vmem>>, vector<128x128xf32>
    %c0_3 = arith.constant 0 : index
    %c0_4 = arith.constant 0 : index
    %8 = vector.load %arg2[%c0_3, %c0_4] : memref<128x128xbf16, #tpu.memory_space<vmem>>, vector<128x128xbf16>
    %cst = arith.constant dense<0.000000e+00> : vector<128x128xf32>
    %9 = tpu.matmul %8, %6, %cst {dimension_numbers = #tpu.dot_dimension_numbers<[1], [0], [0], [1], [0, 0, 1, 1], [], []>} : vector<128x128xbf16>, vector<128x128xbf16>, vector<128x128xf32> -> vector<128x128xf32>
    %10 = arith.addf %7, %9 : vector<128x128xf32>
    %c0_5 = arith.constant 0 : index
    %c0_6 = arith.constant 0 : index
    %11 = vector.load %arg10[%c0_5, %c0_6] : memref<128x128xf32, #tpu.memory_space<vmem>>, vector<128x128xf32>
    tpu.vector_store %arg10[%c0_5, %c0_6], %10 {strides = array<i32>} : memref<128x128xf32, #tpu.memory_space<vmem>>, vector<128x128xf32>,
    %c0_i32_7 = arith.constant 0 : i32
    %12 = arith.cmpi eq, %arg1, %c0_i32_7 : i32
    %13 = arith.extui %12 : i1 to i32
    %c0_i32_8 = arith.constant 0 : i32
    %14 = arith.cmpi ne, %13, %c0_i32_8 : i32
    scf.if %14 {
      %c0_9 = arith.constant 0 : index
      %c0_10 = arith.constant 0 : index
      %15 = vector.load %arg10[%c0_9, %c0_10] : memref<128x128xf32, #tpu.memory_space<vmem>>, vector<128x128xf32>
      %c0_11 = arith.constant 0 : index
      %c0_12 = arith.constant 0 : index
      %16 = vector.load %arg4[%c0_11, %c0_12] : memref<1x128xf32, #tpu.memory_space<vmem>>, vector<1x128xf32>
      %17 = vector.broadcast %16 : vector<1x128xf32> to vector<128x128xf32>
      %18 = arith.addf %15, %17 : vector<128x128xf32>
      %19 = tpu.iota {dimensions = array<i32: 1>} : vector<128x128xi32>
      %c64_i32 = arith.constant 64 : i32
      %20 = vector.broadcast %c64_i32 : i32 to vector<128x128xi32>
      %21 = arith.cmpi slt, %19, %20 : vector<128x128xi32>
      %cst_13 = arith.constant dense<0.000000e+00> : vector<128xf32>
      %22 = vector.multi_reduction <add>, %18, %cst_13 [1] : vector<128x128xf32> to vector<128xf32>
      %23 = vector.shape_cast %22 : vector<128xf32> to vector<128x1xf32>
      %cst_14 = arith.constant 1.562500e-02 : f32
      %24 = vector.broadcast %cst_14 : f32 to vector<128x1xf32>
      %25 = arith.mulf %23, %24 : vector<128x1xf32>
      %26 = vector.broadcast %25 : vector<128x1xf32> to vector<128x128xf32>
      %27 = arith.subf %18, %26 : vector<128x128xf32>
      %cst_15 = arith.constant 0.000000e+00 : f32
      %28 = vector.broadcast %cst_15 : f32 to vector<128x128xf32>
      %29 = arith.select %21, %27, %28 : vector<128x128xi1>, vector<128x128xf32>
      %30 = arith.mulf %29, %29 : vector<128x128xf32>
      %cst_16 = arith.constant dense<0.000000e+00> : vector<128xf32>
      %31 = vector.multi_reduction <add>, %30, %cst_16 [1] : vector<128x128xf32> to vector<128xf32>
      %32 = vector.shape_cast %31 : vector<128xf32> to vector<128x1xf32>
      %cst_17 = arith.constant 1.562500e-02 : f32
      %33 = vector.broadcast %cst_17 : f32 to vector<128x1xf32>
      %34 = arith.mulf %32, %33 : vector<128x1xf32>
      %cst_18 = arith.constant 9.99999974E-6 : f32
      %35 = vector.broadcast %cst_18 : f32 to vector<128x1xf32>
      %36 = arith.addf %34, %35 : vector<128x1xf32>
      %37 = math.rsqrt %36 : vector<128x1xf32>
      %38 = vector.broadcast %37 : vector<128x1xf32> to vector<128x128xf32>
      %39 = arith.mulf %29, %38 : vector<128x128xf32>
      %c0_19 = arith.constant 0 : index
      %c0_20 = arith.constant 0 : index
      %40 = vector.load %arg5[%c0_19, %c0_20] : memref<1x128xf32, #tpu.memory_space<vmem>>, vector<1x128xf32>
      %41 = vector.broadcast %40 : vector<1x128xf32> to vector<128x128xf32>
      %42 = arith.mulf %39, %41 : vector<128x128xf32>
      %c0_21 = arith.constant 0 : index
      %c0_22 = arith.constant 0 : index
      %43 = vector.load %arg6[%c0_21, %c0_22] : memref<1x128xf32, #tpu.memory_space<vmem>>, vector<1x128xf32>
      %44 = vector.broadcast %43 : vector<1x128xf32> to vector<128x128xf32>
      %45 = arith.addf %42, %44 : vector<128x128xf32>
      %cst_23 = arith.constant 0.000000e+00 : f32
      %46 = vector.broadcast %cst_23 : f32 to vector<128x128xf32>
      %47 = arith.cmpf ogt, %45, %46 : vector<128x128xf32>
      %cst_24 = arith.constant 0.00999999977 : f32
      %48 = vector.broadcast %cst_24 : f32 to vector<128x128xf32>
      %49 = arith.mulf %48, %45 : vector<128x128xf32>
      %50 = arith.select %47, %45, %49 : vector<128x128xi1>, vector<128x128xf32>
      %51 = arith.truncf %50 : vector<128x128xf32> to vector<128x128xbf16>
      %c0_25 = arith.constant 0 : index
      %c0_26 = arith.constant 0 : index
      %52 = vector.load %arg7[%c0_25, %c0_26] : memref<128x128xbf16, #tpu.memory_space<vmem>>, vector<128x128xbf16>
      %cst_27 = arith.constant dense<0.000000e+00> : vector<128x128xf32>
      %53 = tpu.matmul %51, %52, %cst_27 {dimension_numbers = #tpu.dot_dimension_numbers<[1], [0], [0], [1], [0, 0, 1, 1], [], []>} : vector<128x128xbf16>, vector<128x128xbf16>, vector<128x128xf32> -> vector<128x128xf32>
      %c0_28 = arith.constant 0 : index
      %c0_29 = arith.constant 0 : index
      %54 = vector.load %arg8[%c0_28, %c0_29] : memref<1x128xf32, #tpu.memory_space<vmem>>, vector<1x128xf32>
      %55 = vector.broadcast %54 : vector<1x128xf32> to vector<128x128xf32>
      %56 = arith.addf %53, %55 : vector<128x128xf32>
      %c0_30 = arith.constant 0 : index
      %c0_31 = arith.constant 0 : index
      %57 = vector.load %arg9[%c0_30, %c0_31] : memref<128x128xf32, #tpu.memory_space<vmem>>, vector<128x128xf32>
      tpu.vector_store %arg9[%c0_30, %c0_31], %56 {strides = array<i32>} : memref<128x128xf32, #tpu.memory_space<vmem>>, vector<128x128xf32>,
    } else {
    }
    return
  }
  func.func @transform_0(%arg0: i32, %arg1: i32) -> (i32, i32) {
    %c0_i32 = arith.constant 0 : i32
    return %arg0, %arg1 : i32, i32
  }
  func.func @transform_1(%arg0: i32, %arg1: i32) -> (i32, i32) {
    %c0_i32 = arith.constant 0 : i32
    %c0_i32_0 = arith.constant 0 : i32
    %c0_i32_1 = arith.constant 0 : i32
    return %c0_i32, %c0_i32_0 : i32, i32
  }
  func.func @transform_2(%arg0: i32, %arg1: i32) -> (i32, i32) {
    %c0_i32 = arith.constant 0 : i32
    %c0_i32_0 = arith.constant 0 : i32
    %c0_i32_1 = arith.constant 0 : i32
    return %c0_i32, %c0_i32_0 : i32, i32
  }
  func.func @transform_3(%arg0: i32, %arg1: i32) -> (i32, i32) {
    %c0_i32 = arith.constant 0 : i32
    %c0_i32_0 = arith.constant 0 : i32
    %c0_i32_1 = arith.constant 0 : i32
    return %c0_i32, %c0_i32_0 : i32, i32
  }
  func.func @transform_4(%arg0: i32, %arg1: i32) -> (i32, i32) {
    %c0_i32 = arith.constant 0 : i32
    %c0_i32_0 = arith.constant 0 : i32
    %c0_i32_1 = arith.constant 0 : i32
    return %c0_i32, %c0_i32_0 : i32, i32
  }
  func.func @transform_5(%arg0: i32, %arg1: i32) -> (i32, i32) {
    %c0_i32 = arith.constant 0 : i32
    %c0_i32_0 = arith.constant 0 : i32
    %c0_i32_1 = arith.constant 0 : i32
    return %c0_i32, %c0_i32_0 : i32, i32
  }
  func.func @transform_6(%arg0: i32, %arg1: i32) -> (i32, i32) {
    %c0_i32 = arith.constant 0 : i32
    %c0_i32_0 = arith.constant 0 : i32
    %c0_i32_1 = arith.constant 0 : i32
    return %c0_i32, %c0_i32_0 : i32, i32
  }
  func.func @transform_7(%arg0: i32, %arg1: i32) -> (i32, i32) {
    %c0_i32 = arith.constant 0 : i32
    %c0_i32_0 = arith.constant 0 : i32
    return %arg0, %c0_i32 : i32, i32
  }
}

</mosaic_0001>

<llo_original>
// kernel: gcn_layer.3
$region0: #{gcn_layer.3}
  #allocation0 [shape = 'u32[]', space=smem, size = 0x4, offset = 0x4, fixed_abs, tag = 'smem constant byte address 0x4 - core index']
  #allocation1 [shape = 'u32[72,128]{1,0:T(1,128)}', space=vmem, size = 0x9000, scoped, tag = 'internal scratch']
  #allocation2 [shape = 'f32[128,128]{1,0:T(8,128)}', space=vmem, size = 0x10000, scoped, tag = 'scratch operand']
  %s0 = inlined_call_operand.vmem [shape: bf16[128,256], index: 0, kind: input, shape index: {}]
  %s1 = inlined_call_operand.vmem [shape: bf16[256,128], index: 1, kind: input, shape index: {}]
  %s2 = inlined_call_operand.vmem [shape: bf16[128,128], index: 2, kind: output, shape index: {}]
  %s3 = sld [smem:[#allocation0]]
  $region26: #{gcn_layer.3} parent=0
    _
  %s5 = ssub.s32 1, %s3
  %s6 = scalar_select 0, %s5, %s3
  // Predicated region
  $region2: #{gcn_layer.3} parent=0 // pred_check
    _
  $region3: #{gcn_layer.3} parent=0 // pred_check_branch
    %8 = sbr.rel (0) target = $region5
  $region4: #{gcn_layer.3} parent=0 // pred_region
    _
  $region5: #{gcn_layer.3} parent=0 // pred_fallthru
    _
  // Predicated region
  $region6: #{gcn_layer.3} parent=0 // pred_check
    _
  $region7: #{gcn_layer.3} parent=0 // pred_check_branch
    %10 = sbr.rel (0) target = $region9
  $region8: #{gcn_layer.3} parent=0 // pred_region
    _
  $region9: #{gcn_layer.3} parent=0 // pred_fallthru
    _
  %p11 = scmp.eq.s32.totalorder 0, 0
  // Predicated region
  $region10: #{gcn_layer.3} parent=0 // pred_check
    %p12 = pneg %p11
  $region11: #{gcn_layer.3} parent=0 // pred_check_branch
    %14 = sbr.rel (%p12) target = $region13
  $region12: #{gcn_layer.3} parent=0 // pred_region
    %15 = vst [vmem:[#allocation2] sm:$0xff] 0.0
    %16 = vst [vmem:[#allocation2 + $0x8] sm:$0xff] 0.0
    %17 = vst [vmem:[#allocation2 + $0x10] sm:$0xff] 0.0
    %18 = vst [vmem:[#allocation2 + $0x18] sm:$0xff] 0.0
    %19 = vst [vmem:[#allocation2 + $0x20] sm:$0xff] 0.0
    %20 = vst [vmem:[#allocation2 + $0x28] sm:$0xff] 0.0
    %21 = vst [vmem:[#allocation2 + $0x30] sm:$0xff] 0.0
    %22 = vst [vmem:[#allocation2 + $0x38] sm:$0xff] 0.0
    %23 = vst [vmem:[#allocation2 + $0x40] sm:$0xff] 0.0
    %24 = vst [vmem:[#allocation2 + $0x48] sm:$0xff] 0.0
    %25 = vst [vmem:[#allocation2 + $0x50] sm:$0xff] 0.0
    %26 = vst [vmem:[#allocation2 + $0x58] sm:$0xff] 0.0
    %27 = vst [vmem:[#allocation2 + $0x60] sm:$0xff] 0.0
    %28 = vst [vmem:[#allocation2 + $0x68] sm:$0xff] 0.0
    %29 = vst [vmem:[#allocation2 + $0x70] sm:$0xff] 0.0
    %30 = vst [vmem:[#allocation2 + $0x78] sm:$0xff] 0.0
  $region13: #{gcn_layer.3} parent=0 // pred_fallthru
    _
  %v31 = vld [vmem:[#allocation2] sm:$0xff]
  %v32 = vld [vmem:[#allocation2 + $0x8] sm:$0xff]
  %v33 = vld [vmem:[#allocation2 + $0x10] sm:$0xff]
  %v34 = vld [vmem:[#allocation2 + $0x18] sm:$0xff]
  %v35 = vld [vmem:[#allocation2 + $0x20] sm:$0xff]
  %v36 = vld [vmem:[#allocation2 + $0x28] sm:$0xff]
  %v37 = vld [vmem:[#allocation2 + $0x30] sm:$0xff]
  %v38 = vld [vmem:[#allocation2 + $0x38] sm:$0xff]
  %v39 = vld [vmem:[#allocation2 + $0x40] sm:$0xff]
  %v40 = vld [vmem:[#allocation2 + $0x48] sm:$0xff]
  %v41 = vld [vmem:[#allocation2 + $0x50] sm:$0xff]
  %v42 = vld [vmem:[#allocation2 + $0x58] sm:$0xff]
  %v43 = vld [vmem:[#allocation2 + $0x60] sm:$0xff]
  %v44 = vld [vmem:[#allocation2 + $0x68] sm:$0xff]
  %v45 = vld [vmem:[#allocation2 + $0x70] sm:$0xff]
  %v46 = vld [vmem:[#allocation2 + $0x78] sm:$0xff]
  %v47 = vld [vmem:[%s0] sm:$0xff]
  %v48 = vld [vmem:[%s0 + $0x8] sm:$0xff]
  %v49 = vld [vmem:[%s0 + $0x10] sm:$0xff]
  %v50 = vld [vmem:[%s0 + $0x18] sm:$0xff]
  %v51 = vld [vmem:[%s0 + $0x20] sm:$0xff]
  %v52 = vld [vmem:[%s0 + $0x28] sm:$0xff]
  %v53 = vld [vmem:[%s0 + $0x30] sm:$0xff]
  %v54 = vld [vmem:[%s0 + $0x38] sm:$0xff]
  %v55 = vld [vmem:[%s0 + $0x40] sm:$0xff]
  %v56 = vld [vmem:[%s0 + $0x48] sm:$0xff]
  %v57 = vld [vmem:[%s0 + $0x50] sm:$0xff]
  %v58 = vld [vmem:[%s0 + $0x58] sm:$0xff]
  %v59 = vld [vmem:[%s0 + $0x60] sm:$0xff]
  %v60 = vld [vmem:[%s0 + $0x68] sm:$0xff]
  %v61 = vld [vmem:[%s0 + $0x70] sm:$0xff]
  %v62 = vld [vmem:[%s0 + $0x78] sm:$0xff]
  %v63 = vld [vmem:[%s1] sm:$0xf]
  %v64 = vld [vmem:[%s1 + $0x4] sm:$0xf]
  %v65 = vld [vmem:[%s1 + $0x8] sm:$0xf]
  %v66 = vld [vmem:[%s1 + $0xc] sm:$0xf]
  %v67 = vld [vmem:[%s1 + $0x10] sm:$0xf]
  %v68 = vld [vmem:[%s1 + $0x14] sm:$0xf]
  %v69 = vld [vmem:[%s1 + $0x18] sm:$0xf]
  %v70 = vld [vmem:[%s1 + $0x1c] sm:$0xf]
  %v71 = vld [vmem:[%s1 + $0x20] sm:$0xf]
  %v72 = vld [vmem:[%s1 + $0x24] sm:$0xf]
  %v73 = vld [vmem:[%s1 + $0x28] sm:$0xf]
  %v74 = vld [vmem:[%s1 + $0x2c] sm:$0xf]
  %v75 = vld [vmem:[%s1 + $0x30] sm:$0xf]
  %v76 = vld [vmem:[%s1 + $0x34] sm:$0xf]
  %v77 = vld [vmem:[%s1 + $0x38] sm:$0xf]
  %v78 = vld [vmem:[%s1 + $0x3c] sm:$0xf]
  %v79 = vld [vmem:[%s1 + $0x40] sm:$0xf]
  %v80 = vld [vmem:[%s1 + $0x44] sm:$0xf]
  %v81 = vld [vmem:[%s1 + $0x48] sm:$0xf]
  %v82 = vld [vmem:[%s1 + $0x4c] sm:$0xf]
  %v83 = vld [vmem:[%s1 + $0x50] sm:$0xf]
  %v84 = vld [vmem:[%s1 + $0x54] sm:$0xf]
  %v85 = vld [vmem:[%s1 + $0x58] sm:$0xf]
  %v86 = vld [vmem:[%s1 + $0x5c] sm:$0xf]
  %v87 = vld [vmem:[%s1 + $0x60] sm:$0xf]
  %v88 = vld [vmem:[%s1 + $0x64] sm:$0xf]
  %v89 = vld [vmem:[%s1 + $0x68] sm:$0xf]
  %v90 = vld [vmem:[%s1 + $0x6c] sm:$0xf]
  %v91 = vld [vmem:[%s1 + $0x70] sm:$0xf]
  %v92 = vld [vmem:[%s1 + $0x74] sm:$0xf]
  %v93 = vld [vmem:[%s1 + $0x78] sm:$0xf]
  %v94 = vld [vmem:[%s1 + $0x7c] sm:$0xf]
  %v111 = vunpack.c.l.b16 %v47
  %v112 = vunpack.c.h.b16 %v47
  %v113 = vunpack.c.l.b16 %v48
  %v114 = vunpack.c.h.b16 %v48
  %v115 = vunpack.c.l.b16 %v49
  %v116 = vunpack.c.h.b16 %v49
  %v117 = vunpack.c.l.b16 %v50
  %v118 = vunpack.c.h.b16 %v50
  %v119 = vunpack.c.l.b16 %v51
  %v120 = vunpack.c.h.b16 %v51
  %v121 = vunpack.c.l.b16 %v52
  %v122 = vunpack.c.h.b16 %v52
  %v123 = vunpack.c.l.b16 %v53
  %v124 = vunpack.c.h.b16 %v53
  %v125 = vunpack.c.l.b16 %v54
  %v126 = vunpack.c.h.b16 %v54
  %v127 = vunpack.c.l.b16 %v55
  %v128 = vunpack.c.h.b16 %v55
  %v129 = vunpack.c.l.b16 %v56
  %v130 = vunpack.c.h.b16 %v56
  %v131 = vunpack.c.l.b16 %v57
  %v132 = vunpack.c.h.b16 %v57
  %v133 = vunpack.c.l.b16 %v58
  %v134 = vunpack.c.h.b16 %v58
  %v135 = vunpack.c.l.b16 %v59
  %v136 = vunpack.c.h.b16 %v59
  %v137 = vunpack.c.l.b16 %v60
  %v138 = vunpack.c.h.b16 %v60
  %v139 = vunpack.c.l.b16 %v61
  %v140 = vunpack.c.h.b16 %v61
  %v141 = vunpack.c.l.b16 %v62
  %v142 = vunpack.c.h.b16 %v62
  %v143 = vpack.c.b16 %v113, %v111
  %v144 = vpack.c.b16 %v114, %v112
  %v145 = vpack.c.b16 %v117, %v115
  %v146 = vpack.c.b16 %v118, %v116
  %v147 = vpack.c.b16 %v121, %v119
  %v148 = vpack.c.b16 %v122, %v120
  %v149 = vpack.c.b16 %v125, %v123
  %v150 = vpack.c.b16 %v126, %v124
  %v151 = vpack.c.b16 %v129, %v127
  %v152 = vpack.c.b16 %v130, %v128
  %v153 = vpack.c.b16 %v133, %v131
  %v154 = vpack.c.b16 %v134, %v132
  %v155 = vpack.c.b16 %v137, %v135
  %v156 = vpack.c.b16 %v138, %v136
  %v157 = vpack.c.b16 %v141, %v139
  %v158 = vpack.c.b16 %v142, %v140
  %v207 = vunpack.c.l.b16 %v63
  %v208 = vunpack.c.l.b16 %v64
  %v209 = vunpack.c.l.b16 %v65
  %v210 = vunpack.c.l.b16 %v66
  %v211 = vunpack.c.l.b16 %v67
  %v212 = vunpack.c.l.b16 %v68
  %v213 = vunpack.c.l.b16 %v69
  %v214 = vunpack.c.l.b16 %v70
  %v215 = vunpack.c.l.b16 %v71
  %v216 = vunpack.c.l.b16 %v72
  %v217 = vunpack.c.l.b16 %v73
  %v218 = vunpack.c.l.b16 %v74
  %v219 = vunpack.c.l.b16 %v75
  %v220 = vunpack.c.l.b16 %v76
  %v221 = vunpack.c.l.b16 %v77
  %v222 = vunpack.c.l.b16 %v78
  %v223 = vunpack.c.l.b16 %v79
  %v224 = vunpack.c.l.b16 %v80
  %v225 = vunpack.c.l.b16 %v81
  %v226 = vunpack.c.l.b16 %v82
  %v227 = vunpack.c.l.b16 %v83
  %v228 = vunpack.c.l.b16 %v84
  %v229 = vunpack.c.l.b16 %v85
  %v230 = vunpack.c.l.b16 %v86
  %v231 = vunpack.c.l.b16 %v87
  %v232 = vunpack.c.l.b16 %v88
  %v233 = vunpack.c.l.b16 %v89
  %v234 = vunpack.c.l.b16 %v90
  %v235 = vunpack.c.l.b16 %v91
  %v236 = vunpack.c.l.b16 %v92
  %v237 = vunpack.c.l.b16 %v93
  %v238 = vunpack.c.l.b16 %v94
  %v239 = vpack.c.b16 %v208, %v207
  %v240 = vpack.c.b16 %v210, %v209
  %v241 = vpack.c.b16 %v212, %v211
  %v242 = vpack.c.b16 %v214, %v213
  %v243 = vpack.c.b16 %v216, %v215
  %v244 = vpack.c.b16 %v218, %v217
  %v245 = vpack.c.b16 %v220, %v219
  %v246 = vpack.c.b16 %v222, %v221
  %v247 = vpack.c.b16 %v224, %v223
  %v248 = vpack.c.b16 %v226, %v225
  %v249 = vpack.c.b16 %v228, %v227
  %v250 = vpack.c.b16 %v230, %v229
  %v251 = vpack.c.b16 %v232, %v231
  %v252 = vpack.c.b16 %v234, %v233
  %v253 = vpack.c.b16 %v236, %v235
  %v254 = vpack.c.b16 %v238, %v237
  %271 = vmatpush.bf16.msra.mxu0 %v246
  %272 = vmatpush.bf16.msra.mxu0 %v245
  %273 = vmatpush.bf16.msra.mxu0 %v244
  %274 = vmatpush.bf16.msra.mxu0 %v243
  %275 = vmatpush.bf16.msra.mxu0 %v242
  %276 = vmatpush.bf16.msra.mxu0 %v241
  %277 = vmatpush.bf16.msra.mxu0 %v240
  %278 = vmatpush.bf16.msra.mxu0 %v239
  %279 = vmatmul.bf16.gmra.mxu0 %v143
  %v280 = vpop.f32.mrf.mxu0
  %v281 = vadd.f32 0.0, %v280
  %v282 = vpop.f32.mrf.mxu0
  %v283 = vadd.f32 0.0, %v282
  %284 = vmatmul.bf16.gmra.mxu0 %v145
  %v285 = vpop.f32.mrf.mxu0
  %v286 = vadd.f32 0.0, %v285
  %v287 = vpop.f32.mrf.mxu0
  %v288 = vadd.f32 0.0, %v287
  %289 = vmatmul.bf16.gmra.mxu0 %v147
  %v290 = vpop.f32.mrf.mxu0
  %v291 = vadd.f32 0.0, %v290
  %v292 = vpop.f32.mrf.mxu0
  %v293 = vadd.f32 0.0, %v292
  %294 = vmatmul.bf16.gmra.mxu0 %v149
  %v295 = vpop.f32.mrf.mxu0
  %v296 = vadd.f32 0.0, %v295
  %v297 = vpop.f32.mrf.mxu0
  %v298 = vadd.f32 0.0, %v297
  %299 = vmatmul.bf16.gmra.mxu0 %v151
  %v300 = vpop.f32.mrf.mxu0
  %v301 = vadd.f32 0.0, %v300
  %v302 = vpop.f32.mrf.mxu0
  %v303 = vadd.f32 0.0, %v302
  %304 = vmatmul.bf16.gmra.mxu0 %v153
  %v305 = vpop.f32.mrf.mxu0
  %v306 = vadd.f32 0.0, %v305
  %v307 = vpop.f32.mrf.mxu0
  %v308 = vadd.f32 0.0, %v307
  %309 = vmatmul.bf16.gmra.mxu0 %v155
  %v310 = vpop.f32.mrf.mxu0
  %v311 = vadd.f32 0.0, %v310
  %v312 = vpop.f32.mrf.mxu0
  %v313 = vadd.f32 0.0, %v312
  %314 = vmatmul.bf16.gmra.mxu0 %v157
  %v315 = vpop.f32.mrf.mxu0
  %v316 = vadd.f32 0.0, %v315
  %v317 = vpop.f32.mrf.mxu0
  %v318 = vadd.f32 0.0, %v317
  %319 = vdwg.mxu0
  %320 = vmatpush.bf16.msra.mxu0 %v254
  %321 = vmatpush.bf16.msra.mxu0 %v253
  %322 = vmatpush.bf16.msra.mxu0 %v252
  %323 = vmatpush.bf16.msra.mxu0 %v251
  %324 = vmatpush.bf16.msra.mxu0 %v250
  %325 = vmatpush.bf16.msra.mxu0 %v249
  %326 = vmatpush.bf16.msra.mxu0 %v248
  %327 = vmatpush.bf16.msra.mxu0 %v247
  %328 = vmatmul.bf16.gmra.mxu0 %v144
  %v329 = vpop.f32.mrf.mxu0
  %v330 = vadd.f32 %v281, %v329
  %v331 = vpop.f32.mrf.mxu0
  %v332 = vadd.f32 %v283, %v331
  %333 = vmatmul.bf16.gmra.mxu0 %v146
  %v334 = vpop.f32.mrf.mxu0
  %v335 = vadd.f32 %v286, %v334
  %v336 = vpop.f32.mrf.mxu0
  %v337 = vadd.f32 %v288, %v336
  %338 = vmatmul.bf16.gmra.mxu0 %v148
  %v339 = vpop.f32.mrf.mxu0
  %v340 = vadd.f32 %v291, %v339
  %v341 = vpop.f32.mrf.mxu0
  %v342 = vadd.f32 %v293, %v341
  %343 = vmatmul.bf16.gmra.mxu0 %v150
  %v344 = vpop.f32.mrf.mxu0
  %v345 = vadd.f32 %v296, %v344
  %v346 = vpop.f32.mrf.mxu0
  %v347 = vadd.f32 %v298, %v346
  %348 = vmatmul.bf16.gmra.mxu0 %v152
  %v349 = vpop.f32.mrf.mxu0
  %v350 = vadd.f32 %v301, %v349
  %v351 = vpop.f32.mrf.mxu0
  %v352 = vadd.f32 %v303, %v351
  %353 = vmatmul.bf16.gmra.mxu0 %v154
  %v354 = vpop.f32.mrf.mxu0
  %v355 = vadd.f32 %v306, %v354
  %v356 = vpop.f32.mrf.mxu0
  %v357 = vadd.f32 %v308, %v356
  %358 = vmatmul.bf16.gmra.mxu0 %v156
  %v359 = vpop.f32.mrf.mxu0
  %v360 = vadd.f32 %v311, %v359
  %v361 = vpop.f32.mrf.mxu0
  %v362 = vadd.f32 %v313, %v361
  %363 = vmatmul.bf16.gmra.mxu0 %v158
  %v364 = vpop.f32.mrf.mxu0
  %v365 = vadd.f32 %v316, %v364
  %v366 = vpop.f32.mrf.mxu0
  %v367 = vadd.f32 %v318, %v366
  %368 = vdwg.mxu0
  %v369 = vadd.f32 %v31, %v330
  %v370 = vadd.f32 %v32, %v332
  %v371 = vadd.f32 %v33, %v335
  %v372 = vadd.f32 %v34, %v337
  %v373 = vadd.f32 %v35, %v340
  %v374 = vadd.f32 %v36, %v342
  %v375 = vadd.f32 %v37, %v345
  %v376 = vadd.f32 %v38, %v347
  %v377 = vadd.f32 %v39, %v350
  %v378 = vadd.f32 %v40, %v352
  %v379 = vadd.f32 %v41, %v355
  %v380 = vadd.f32 %v42, %v357
  %v381 = vadd.f32 %v43, %v360
  %v382 = vadd.f32 %v44, %v362
  %v383 = vadd.f32 %v45, %v365
  %v384 = vadd.f32 %v46, %v367
  %385 = vst [vmem:[#allocation2] sm:$0xff] %v369
  %386 = vst [vmem:[#allocation2 + $0x8] sm:$0xff] %v370
  %387 = vst [vmem:[#allocation2 + $0x10] sm:$0xff] %v371
  %388 = vst [vmem:[#allocation2 + $0x18] sm:$0xff] %v372
  %389 = vst [vmem:[#allocation2 + $0x20] sm:$0xff] %v373
  %390 = vst [vmem:[#allocation2 + $0x28] sm:$0xff] %v374
  %391 = vst [vmem:[#allocation2 + $0x30] sm:$0xff] %v375
  %392 = vst [vmem:[#allocation2 + $0x38] sm:$0xff] %v376
  %393 = vst [vmem:[#allocation2 + $0x40] sm:$0xff] %v377
  %394 = vst [vmem:[#allocation2 + $0x48] sm:$0xff] %v378
  %395 = vst [vmem:[#allocation2 + $0x50] sm:$0xff] %v379
  %396 = vst [vmem:[#allocation2 + $0x58] sm:$0xff] %v380
  %397 = vst [vmem:[#allocation2 + $0x60] sm:$0xff] %v381
  %398 = vst [vmem:[#allocation2 + $0x68] sm:$0xff] %v382
  %399 = vst [vmem:[#allocation2 + $0x70] sm:$0xff] %v383
  %400 = vst [vmem:[#allocation2 + $0x78] sm:$0xff] %v384
  // Predicated region
  $region14: #{gcn_layer.3} parent=0 // pred_check
    %p401 = pneg %p11
  $region15: #{gcn_layer.3} parent=0 // pred_check_branch
    %403 = sbr.rel (%p401) target = $region17
  $region16: #{gcn_layer.3} parent=0 // pred_region
    %v404 = vld [vmem:[#allocation2] sm:$0xff]
    %v405 = vld [vmem:[#allocation2 + $0x8] sm:$0xff]
    %v406 = vld [vmem:[#allocation2 + $0x10] sm:$0xff]
    %v407 = vld [vmem:[#allocation2 + $0x18] sm:$0xff]
    %v408 = vld [vmem:[#allocation2 + $0x20] sm:$0xff]
    %v409 = vld [vmem:[#allocation2 + $0x28] sm:$0xff]
    %v410 = vld [vmem:[#allocation2 + $0x30] sm:$0xff]
    %v411 = vld [vmem:[#allocation2 + $0x38] sm:$0xff]
    %v412 = vld [vmem:[#allocation2 + $0x40] sm:$0xff]
    %v413 = vld [vmem:[#allocation2 + $0x48] sm:$0xff]
    %v414 = vld [vmem:[#allocation2 + $0x50] sm:$0xff]
    %v415 = vld [vmem:[#allocation2 + $0x58] sm:$0xff]
    %v416 = vld [vmem:[#allocation2 + $0x60] sm:$0xff]
    %v417 = vld [vmem:[#allocation2 + $0x68] sm:$0xff]
    %v418 = vld [vmem:[#allocation2 + $0x70] sm:$0xff]
    %v419 = vld [vmem:[#allocation2 + $0x78] sm:$0xff]
    %v420 = vpack.c.bf16 %v404, %v404
    %v421 = vpack.c.bf16 %v405, %v405
    %v422 = vpack.c.bf16 %v406, %v406
    %v423 = vpack.c.bf16 %v407, %v407
    %v424 = vpack.c.bf16 %v408, %v408
    %v425 = vpack.c.bf16 %v409, %v409
    %v426 = vpack.c.bf16 %v410, %v410
    %v427 = vpack.c.bf16 %v411, %v411
    %v428 = vpack.c.bf16 %v412, %v412
    %v429 = vpack.c.bf16 %v413, %v413
    %v430 = vpack.c.bf16 %v414, %v414
    %v431 = vpack.c.bf16 %v415, %v415
    %v432 = vpack.c.bf16 %v416, %v416
    %v433 = vpack.c.bf16 %v417, %v417
    %v434 = vpack.c.bf16 %v418, %v418
    %v435 = vpack.c.bf16 %v419, %v419
    %436 = vst [vmem:[%s2] sm:$0xf] %v420
    %437 = vst [vmem:[%s2 + $0x4] sm:$0xf] %v421
    %438 = vst [vmem:[%s2 + $0x8] sm:$0xf] %v422
    %439 = vst [vmem:[%s2 + $0xc] sm:$0xf] %v423
    %440 = vst [vmem:[%s2 + $0x10] sm:$0xf] %v424
    %441 = vst [vmem:[%s2 + $0x14] sm:$0xf] %v425
    %442 = vst [vmem:[%s2 + $0x18] sm:$0xf] %v426
    %443 = vst [vmem:[%s2 + $0x1c] sm:$0xf] %v427
    %444 = vst [vmem:[%s2 + $0x20] sm:$0xf] %v428
    %445 = vst [vmem:[%s2 + $0x24] sm:$0xf] %v429
    %446 = vst [vmem:[%s2 + $0x28] sm:$0xf] %v430
    %447 = vst [vmem:[%s2 + $0x2c] sm:$0xf] %v431
    %448 = vst [vmem:[%s2 + $0x30] sm:$0xf] %v432
    %449 = vst [vmem:[%s2 + $0x34] sm:$0xf] %v433
    %450 = vst [vmem:[%s2 + $0x38] sm:$0xf] %v434
    %451 = vst [vmem:[%s2 + $0x3c] sm:$0xf] %v435
  $region17: #{gcn_layer.3} parent=0 // pred_fallthru
    _
  // Predicated region
  $region18: #{gcn_layer.3} parent=0 // pred_check
    _
  $region19: #{gcn_layer.3} parent=0 // pred_check_branch
    %453 = sbr.rel (0) target = $region21
  $region20: #{gcn_layer.3} parent=0 // pred_region
    _
  $region21: #{gcn_layer.3} parent=0 // pred_fallthru
    _
  // Predicated region
  $region22: #{gcn_layer.3} parent=0 // pred_check
    _
  $region23: #{gcn_layer.3} parent=0 // pred_check_branch
    %455 = sbr.rel (0) target = $region25
  $region24: #{gcn_layer.3} parent=0 // pred_region
    _
  $region25: #{gcn_layer.3} parent=0 // pred_fallthru
    _

// kernel: gcn_layer.4
$region0: #{gcn_layer.4}
  #allocation0 [shape = 'u32[]', space=smem, size = 0x4, offset = 0x4, fixed_abs, tag = 'smem constant byte address 0x4 - core index']
  #allocation1 [shape = 'u32[72,128]{1,0:T(1,128)}', space=vmem, size = 0x9000, scoped, tag = 'internal scratch']
  #allocation2 [shape = 'f32[128,128]{1,0:T(8,128)}', space=vmem, size = 0x10000, scoped, tag = 'scratch operand']
  %s0 = inlined_call_operand.vmem [shape: bf16[128,128], index: 0, kind: input, shape index: {}]
  %s1 = inlined_call_operand.vmem [shape: bf16[128,128], index: 1, kind: input, shape index: {}]
  %s2 = inlined_call_operand.vmem [shape: f32[1,128], index: 2, kind: input, shape index: {}]
  %s3 = inlined_call_operand.vmem [shape: f32[1,128], index: 3, kind: input, shape index: {}]
  %s4 = inlined_call_operand.vmem [shape: f32[1,128], index: 4, kind: input, shape index: {}]
  %s5 = inlined_call_operand.vmem [shape: bf16[128,128], index: 5, kind: input, shape index: {}]
  %s6 = inlined_call_operand.vmem [shape: f32[1,128], index: 6, kind: input, shape index: {}]
  %s7 = inlined_call_operand.vmem [shape: bf16[128,128], index: 7, kind: output, shape index: {}]
  %s8 = sld [smem:[#allocation0]]
  $region46: #{gcn_layer.4} parent=0
    _
  %s10 = ssub.s32 1, %s8
  %s11 = scalar_select 0, %s10, %s8
  // Predicated region
  $region2: #{gcn_layer.4} parent=0 // pred_check
    _
  $region3: #{gcn_layer.4} parent=0 // pred_check_branch
    %13 = sbr.rel (0) target = $region5
  $region4: #{gcn_layer.4} parent=0 // pred_region
    _
  $region5: #{gcn_layer.4} parent=0 // pred_fallthru
    _
  // Predicated region
  $region6: #{gcn_layer.4} parent=0 // pred_check
    _
  $region7: #{gcn_layer.4} parent=0 // pred_check_branch
    %15 = sbr.rel (0) target = $region9
  $region8: #{gcn_layer.4} parent=0 // pred_region
    _
  $region9: #{gcn_layer.4} parent=0 // pred_fallthru
    _
  // Predicated region
  $region10: #{gcn_layer.4} parent=0 // pred_check
    _
  $region11: #{gcn_layer.4} parent=0 // pred_check_branch
    %17 = sbr.rel (0) target = $region13
  $region12: #{gcn_layer.4} parent=0 // pred_region
    _
  $region13: #{gcn_layer.4} parent=0 // pred_fallthru
    _
  // Predicated region
  $region14: #{gcn_layer.4} parent=0 // pred_check
    _
  $region15: #{gcn_layer.4} parent=0 // pred_check_branch
    %19 = sbr.rel (0) target = $region17
  $region16: #{gcn_layer.4} parent=0 // pred_region
    _
  $region17: #{gcn_layer.4} parent=0 // pred_fallthru
    _
  // Predicated region
  $region18: #{gcn_layer.4} parent=0 // pred_check
    _
  $region19: #{gcn_layer.4} parent=0 // pred_check_branch
    %21 = sbr.rel (0) target = $region21
  $region20: #{gcn_layer.4} parent=0 // pred_region
    _
  $region21: #{gcn_layer.4} parent=0 // pred_fallthru
    _
  // Predicated region
  $region22: #{gcn_layer.4} parent=0 // pred_check
    _
  $region23: #{gcn_layer.4} parent=0 // pred_check_branch
    %23 = sbr.rel (0) target = $region25
  $region24: #{gcn_layer.4} parent=0 // pred_region
    _
  $region25: #{gcn_layer.4} parent=0 // pred_fallthru
    _
  // Predicated region
  $region26: #{gcn_layer.4} parent=0 // pred_check
    _
  $region27: #{gcn_layer.4} parent=0 // pred_check_branch
    %25 = sbr.rel (0) target = $region29
  $region28: #{gcn_layer.4} parent=0 // pred_region
    _
  $region29: #{gcn_layer.4} parent=0 // pred_fallthru
    _
  %p26 = scmp.eq.s32.totalorder 0, 0
  // Predicated region
  $region30: #{gcn_layer.4} parent=0 // pred_check
    %p27 = pneg %p26
  $region31: #{gcn_layer.4} parent=0 // pred_check_branch
    %29 = sbr.rel (%p27) target = $region33
  $region32: #{gcn_layer.4} parent=0 // pred_region
    %30 = vst [vmem:[#allocation2] sm:$0xff] 0.0
    %31 = vst [vmem:[#allocation2 + $0x8] sm:$0xff] 0.0
    %32 = vst [vmem:[#allocation2 + $0x10] sm:$0xff] 0.0
    %33 = vst [vmem:[#allocation2 + $0x18] sm:$0xff] 0.0
    %34 = vst [vmem:[#allocation2 + $0x20] sm:$0xff] 0.0
    %35 = vst [vmem:[#allocation2 + $0x28] sm:$0xff] 0.0
    %36 = vst [vmem:[#allocation2 + $0x30] sm:$0xff] 0.0
    %37 = vst [vmem:[#allocation2 + $0x38] sm:$0xff] 0.0
    %38 = vst [vmem:[#allocation2 + $0x40] sm:$0xff] 0.0
    %39 = vst [vmem:[#allocation2 + $0x48] sm:$0xff] 0.0
    %40 = vst [vmem:[#allocation2 + $0x50] sm:$0xff] 0.0
    %41 = vst [vmem:[#allocation2 + $0x58] sm:$0xff] 0.0
    %42 = vst [vmem:[#allocation2 + $0x60] sm:$0xff] 0.0
    %43 = vst [vmem:[#allocation2 + $0x68] sm:$0xff] 0.0
    %44 = vst [vmem:[#allocation2 + $0x70] sm:$0xff] 0.0
    %45 = vst [vmem:[#allocation2 + $0x78] sm:$0xff] 0.0
  $region33: #{gcn_layer.4} parent=0 // pred_fallthru
    _
  %s46 = smul.u32 0, 128
  %s47 = sshra.s32 %s46, 3
  %s48 = sand.u32 %s46, 7
  %s49 = smul.addr %s47, 4
  %s50 = scalar_lea.vmem %s1, %s49
  %v51 = vld [vmem:[%s50] sm:$0xf]
  %v52 = vld [vmem:[%s50 + $0x4] sm:$0xf]
  %v53 = vld [vmem:[%s50 + $0x8] sm:$0xf]
  %v54 = vld [vmem:[%s50 + $0xc] sm:$0xf]
  %v55 = vld [vmem:[%s50 + $0x10] sm:$0xf]
  %v56 = vld [vmem:[%s50 + $0x14] sm:$0xf]
  %v57 = vld [vmem:[%s50 + $0x18] sm:$0xf]
  %v58 = vld [vmem:[%s50 + $0x1c] sm:$0xf]
  %v59 = vld [vmem:[%s50 + $0x20] sm:$0xf]
  %v60 = vld [vmem:[%s50 + $0x24] sm:$0xf]
  %v61 = vld [vmem:[%s50 + $0x28] sm:$0xf]
  %v62 = vld [vmem:[%s50 + $0x2c] sm:$0xf]
  %v63 = vld [vmem:[%s50 + $0x30] sm:$0xf]
  %v64 = vld [vmem:[%s50 + $0x34] sm:$0xf]
  %v65 = vld [vmem:[%s50 + $0x38] sm:$0xf]
  %v66 = vld [vmem:[%s50 + $0x3c] sm:$0xf]
  %v67 = vld [vmem:[#allocation2] sm:$0xff]
  %v68 = vld [vmem:[#allocation2 + $0x8] sm:$0xff]
  %v69 = vld [vmem:[#allocation2 + $0x10] sm:$0xff]
  %v70 = vld [vmem:[#allocation2 + $0x18] sm:$0xff]
  %v71 = vld [vmem:[#allocation2 + $0x20] sm:$0xff]
  %v72 = vld [vmem:[#allocation2 + $0x28] sm:$0xff]
  %v73 = vld [vmem:[#allocation2 + $0x30] sm:$0xff]
  %v74 = vld [vmem:[#allocation2 + $0x38] sm:$0xff]
  %v75 = vld [vmem:[#allocation2 + $0x40] sm:$0xff]
  %v76 = vld [vmem:[#allocation2 + $0x48] sm:$0xff]
  %v77 = vld [vmem:[#allocation2 + $0x50] sm:$0xff]
  %v78 = vld [vmem:[#allocation2 + $0x58] sm:$0xff]
  %v79 = vld [vmem:[#allocation2 + $0x60] sm:$0xff]
  %v80 = vld [vmem:[#allocation2 + $0x68] sm:$0xff]
  %v81 = vld [vmem:[#allocation2 + $0x70] sm:$0xff]
  %v82 = vld [vmem:[#allocation2 + $0x78] sm:$0xff]
  %v83 = vld [vmem:[%s0] sm:$0xf]
  %v84 = vld [vmem:[%s0 + $0x4] sm:$0xf]
  %v85 = vld [vmem:[%s0 + $0x8] sm:$0xf]
  %v86 = vld [vmem:[%s0 + $0xc] sm:$0xf]
  %v87 = vld [vmem:[%s0 + $0x10] sm:$0xf]
  %v88 = vld [vmem:[%s0 + $0x14] sm:$0xf]
  %v89 = vld [vmem:[%s0 + $0x18] sm:$0xf]
  %v90 = vld [vmem:[%s0 + $0x1c] sm:$0xf]
  %v91 = vld [vmem:[%s0 + $0x20] sm:$0xf]
  %v92 = vld [vmem:[%s0 + $0x24] sm:$0xf]
  %v93 = vld [vmem:[%s0 + $0x28] sm:$0xf]
  %v94 = vld [vmem:[%s0 + $0x2c] sm:$0xf]
  %v95 = vld [vmem:[%s0 + $0x30] sm:$0xf]
  %v96 = vld [vmem:[%s0 + $0x34] sm:$0xf]
  %v97 = vld [vmem:[%s0 + $0x38] sm:$0xf]
  %v98 = vld [vmem:[%s0 + $0x3c] sm:$0xf]
  %v115 = vunpack.c.l.b16 %v83
  %v116 = vunpack.c.l.b16 %v84
  %v117 = vunpack.c.l.b16 %v85
  %v118 = vunpack.c.l.b16 %v86
  %v119 = vunpack.c.l.b16 %v87
  %v120 = vunpack.c.l.b16 %v88
  %v121 = vunpack.c.l.b16 %v89
  %v122 = vunpack.c.l.b16 %v90
  %v123 = vunpack.c.l.b16 %v91
  %v124 = vunpack.c.l.b16 %v92
  %v125 = vunpack.c.l.b16 %v93
  %v126 = vunpack.c.l.b16 %v94
  %v127 = vunpack.c.l.b16 %v95
  %v128 = vunpack.c.l.b16 %v96
  %v129 = vunpack.c.l.b16 %v97
  %v130 = vunpack.c.l.b16 %v98
  %v131 = vpack.c.b16 %v116, %v115
  %v132 = vpack.c.b16 %v118, %v117
  %v133 = vpack.c.b16 %v120, %v119
  %v134 = vpack.c.b16 %v122, %v121
  %v135 = vpack.c.b16 %v124, %v123
  %v136 = vpack.c.b16 %v126, %v125
  %v137 = vpack.c.b16 %v128, %v127
  %v138 = vpack.c.b16 %v130, %v129
  %v163 = vunpack.c.l.b16 %v51
  %v164 = vunpack.c.l.b16 %v52
  %v165 = vunpack.c.l.b16 %v53
  %v166 = vunpack.c.l.b16 %v54
  %v167 = vunpack.c.l.b16 %v55
  %v168 = vunpack.c.l.b16 %v56
  %v169 = vunpack.c.l.b16 %v57
  %v170 = vunpack.c.l.b16 %v58
  %v171 = vunpack.c.l.b16 %v59
  %v172 = vunpack.c.l.b16 %v60
  %v173 = vunpack.c.l.b16 %v61
  %v174 = vunpack.c.l.b16 %v62
  %v175 = vunpack.c.l.b16 %v63
  %v176 = vunpack.c.l.b16 %v64
  %v177 = vunpack.c.l.b16 %v65
  %v178 = vunpack.c.l.b16 %v66
  %v179 = vpack.c.b16 %v164, %v163
  %v180 = vpack.c.b16 %v166, %v165
  %v181 = vpack.c.b16 %v168, %v167
  %v182 = vpack.c.b16 %v170, %v169
  %v183 = vpack.c.b16 %v172, %v171
  %v184 = vpack.c.b16 %v174, %v173
  %v185 = vpack.c.b16 %v176, %v175
  %v186 = vpack.c.b16 %v178, %v177
  %195 = vmatpush.bf16.msra.mxu0 %v186
  %196 = vmatpush.bf16.msra.mxu0 %v185
  %197 = vmatpush.bf16.msra.mxu0 %v184
  %198 = vmatpush.bf16.msra.mxu0 %v183
  %199 = vmatpush.bf16.msra.mxu0 %v182
  %200 = vmatpush.bf16.msra.mxu0 %v181
  %201 = vmatpush.bf16.msra.mxu0 %v180
  %202 = vmatpush.bf16.msra.mxu0 %v179
  %203 = vmatmul.bf16.gmra.mxu0 %v131
  %v204 = vpop.f32.mrf.mxu0
  %v205 = vadd.f32 0.0, %v204
  %v206 = vpop.f32.mrf.mxu0
  %v207 = vadd.f32 0.0, %v206
  %208 = vmatmul.bf16.gmra.mxu0 %v132
  %v209 = vpop.f32.mrf.mxu0
  %v210 = vadd.f32 0.0, %v209
  %v211 = vpop.f32.mrf.mxu0
  %v212 = vadd.f32 0.0, %v211
  %213 = vmatmul.bf16.gmra.mxu0 %v133
  %v214 = vpop.f32.mrf.mxu0
  %v215 = vadd.f32 0.0, %v214
  %v216 = vpop.f32.mrf.mxu0
  %v217 = vadd.f32 0.0, %v216
  %218 = vmatmul.bf16.gmra.mxu0 %v134
  %v219 = vpop.f32.mrf.mxu0
  %v220 = vadd.f32 0.0, %v219
  %v221 = vpop.f32.mrf.mxu0
  %v222 = vadd.f32 0.0, %v221
  %223 = vmatmul.bf16.gmra.mxu0 %v135
  %v224 = vpop.f32.mrf.mxu0
  %v225 = vadd.f32 0.0, %v224
  %v226 = vpop.f32.mrf.mxu0
  %v227 = vadd.f32 0.0, %v226
  %228 = vmatmul.bf16.gmra.mxu0 %v136
  %v229 = vpop.f32.mrf.mxu0
  %v230 = vadd.f32 0.0, %v229
  %v231 = vpop.f32.mrf.mxu0
  %v232 = vadd.f32 0.0, %v231
  %233 = vmatmul.bf16.gmra.mxu0 %v137
  %v234 = vpop.f32.mrf.mxu0
  %v235 = vadd.f32 0.0, %v234
  %v236 = vpop.f32.mrf.mxu0
  %v237 = vadd.f32 0.0, %v236
  %238 = vmatmul.bf16.gmra.mxu0 %v138
  %v239 = vpop.f32.mrf.mxu0
  %v240 = vadd.f32 0.0, %v239
  %v241 = vpop.f32.mrf.mxu0
  %v242 = vadd.f32 0.0, %v241
  %243 = vdwg.mxu0
  %v244 = vadd.f32 %v67, %v205
  %v245 = vadd.f32 %v68, %v207
  %v246 = vadd.f32 %v69, %v210
  %v247 = vadd.f32 %v70, %v212
  %v248 = vadd.f32 %v71, %v215
  %v249 = vadd.f32 %v72, %v217
  %v250 = vadd.f32 %v73, %v220
  %v251 = vadd.f32 %v74, %v222
  %v252 = vadd.f32 %v75, %v225
  %v253 = vadd.f32 %v76, %v227
  %v254 = vadd.f32 %v77, %v230
  %v255 = vadd.f32 %v78, %v232
  %v256 = vadd.f32 %v79, %v235
  %v257 = vadd.f32 %v80, %v237
  %v258 = vadd.f32 %v81, %v240
  %v259 = vadd.f32 %v82, %v242
  %260 = vst [vmem:[#allocation2] sm:$0xff] %v244
  %261 = vst [vmem:[#allocation2 + $0x8] sm:$0xff] %v245
  %262 = vst [vmem:[#allocation2 + $0x10] sm:$0xff] %v246
  %263 = vst [vmem:[#allocation2 + $0x18] sm:$0xff] %v247
  %264 = vst [vmem:[#allocation2 + $0x20] sm:$0xff] %v248
  %265 = vst [vmem:[#allocation2 + $0x28] sm:$0xff] %v249
  %266 = vst [vmem:[#allocation2 + $0x30] sm:$0xff] %v250
  %267 = vst [vmem:[#allocation2 + $0x38] sm:$0xff] %v251
  %268 = vst [vmem:[#allocation2 + $0x40] sm:$0xff] %v252
  %269 = vst [vmem:[#allocation2 + $0x48] sm:$0xff] %v253
  %270 = vst [vmem:[#allocation2 + $0x50] sm:$0xff] %v254
  %271 = vst [vmem:[#allocation2 + $0x58] sm:$0xff] %v255
  %272 = vst [vmem:[#allocation2 + $0x60] sm:$0xff] %v256
  %273 = vst [vmem:[#allocation2 + $0x68] sm:$0xff] %v257
  %274 = vst [vmem:[#allocation2 + $0x70] sm:$0xff] %v258
  %275 = vst [vmem:[#allocation2 + $0x78] sm:$0xff] %v259
  // Predicated region
  $region34: #{gcn_layer.4} parent=0 // pred_check
    %p276 = pneg %p26
  $region35: #{gcn_layer.4} parent=0 // pred_check_branch
    %278 = sbr.rel (%p276) target = $region37
  $region36: #{gcn_layer.4} parent=0 // pred_region
    %v279 = vld [vmem:[#allocation2] sm:$0xff]
    %v280 = vld [vmem:[#allocation2 + $0x8] sm:$0xff]
    %v281 = vld [vmem:[#allocation2 + $0x10] sm:$0xff]
    %v282 = vld [vmem:[#allocation2 + $0x18] sm:$0xff]
    %v283 = vld [vmem:[#allocation2 + $0x20] sm:$0xff]
    %v284 = vld [vmem:[#allocation2 + $0x28] sm:$0xff]
    %v285 = vld [vmem:[#allocation2 + $0x30] sm:$0xff]
    %v286 = vld [vmem:[#allocation2 + $0x38] sm:$0xff]
    %v287 = vld [vmem:[#allocation2 + $0x40] sm:$0xff]
    %v288 = vld [vmem:[#allocation2 + $0x48] sm:$0xff]
    %v289 = vld [vmem:[#allocation2 + $0x50] sm:$0xff]
    %v290 = vld [vmem:[#allocation2 + $0x58] sm:$0xff]
    %v291 = vld [vmem:[#allocation2 + $0x60] sm:$0xff]
    %v292 = vld [vmem:[#allocation2 + $0x68] sm:$0xff]
    %v293 = vld [vmem:[#allocation2 + $0x70] sm:$0xff]
    %v294 = vld [vmem:[#allocation2 + $0x78] sm:$0xff]
    %v295 = vld [vmem:[%s2] sm:$0x1]
    %v297 = vperm.slane %v295, 0
    %v299 = vadd.f32 %v279, %v297
    %v300 = vadd.f32 %v280, %v297
    %v301 = vadd.f32 %v281, %v297
    %v302 = vadd.f32 %v282, %v297
    %v303 = vadd.f32 %v283, %v297
    %v304 = vadd.f32 %v284, %v297
    %v305 = vadd.f32 %v285, %v297
    %v306 = vadd.f32 %v286, %v297
    %v307 = vadd.f32 %v287, %v297
    %v308 = vadd.f32 %v288, %v297
    %v309 = vadd.f32 %v289, %v297
    %v310 = vadd.f32 %v290, %v297
    %v311 = vadd.f32 %v291, %v297
    %v312 = vadd.f32 %v292, %v297
    %v313 = vadd.f32 %v293, %v297
    %v314 = vadd.f32 %v294, %v297
    %v315 = vlaneseq
    %v316 = vand.u32 %v315, 127
    %vm317 = vcmp.lt.s32.totalorder %v316, 64
    %318 = vadd.xlane.f32.xlu0 %v299
    %v319 = vpop.xlane.xlu0 %318
    %320 = vadd.xlane.f32.xlu0 %v300
    %v321 = vpop.xlane.xlu0 %320
    %322 = vadd.xlane.f32.xlu0 %v301
    %v323 = vpop.xlane.xlu0 %322
    %324 = vadd.xlane.f32.xlu0 %v302
    %v325 = vpop.xlane.xlu0 %324
    %326 = vadd.xlane.f32.xlu0 %v303
    %v327 = vpop.xlane.xlu0 %326
    %328 = vadd.xlane.f32.xlu0 %v304
    %v329 = vpop.xlane.xlu0 %328
    %330 = vadd.xlane.f32.xlu0 %v305
    %v331 = vpop.xlane.xlu0 %330
    %332 = vadd.xlane.f32.xlu0 %v306
    %v333 = vpop.xlane.xlu0 %332
    %334 = vadd.xlane.f32.xlu0 %v307
    %v335 = vpop.xlane.xlu0 %334
    %336 = vadd.xlane.f32.xlu0 %v308
    %v337 = vpop.xlane.xlu0 %336
    %338 = vadd.xlane.f32.xlu0 %v309
    %v339 = vpop.xlane.xlu0 %338
    %340 = vadd.xlane.f32.xlu0 %v310
    %v341 = vpop.xlane.xlu0 %340
    %342 = vadd.xlane.f32.xlu0 %v311
    %v343 = vpop.xlane.xlu0 %342
    %344 = vadd.xlane.f32.xlu0 %v312
    %v345 = vpop.xlane.xlu0 %344
    %346 = vadd.xlane.f32.xlu0 %v313
    %v347 = vpop.xlane.xlu0 %346
    %348 = vadd.xlane.f32.xlu0 %v314
    %v349 = vpop.xlane.xlu0 %348
    %v350 = vmul.f32 %v319, 0.015625
    %v351 = vmul.f32 %v321, 0.015625
    %v352 = vmul.f32 %v323, 0.015625
    %v353 = vmul.f32 %v325, 0.015625
    %v354 = vmul.f32 %v327, 0.015625
    %v355 = vmul.f32 %v329, 0.015625
    %v356 = vmul.f32 %v331, 0.015625
    %v357 = vmul.f32 %v333, 0.015625
    %v358 = vmul.f32 %v335, 0.015625
    %v359 = vmul.f32 %v337, 0.015625
    %v360 = vmul.f32 %v339, 0.015625
    %v361 = vmul.f32 %v341, 0.015625
    %v362 = vmul.f32 %v343, 0.015625
    %v363 = vmul.f32 %v345, 0.015625
    %v364 = vmul.f32 %v347, 0.015625
    %v365 = vmul.f32 %v349, 0.015625
    %v366 = vsub.f32 %v299, %v350
    %v367 = vsub.f32 %v300, %v351
    %v368 = vsub.f32 %v301, %v352
    %v369 = vsub.f32 %v302, %v353
    %v370 = vsub.f32 %v303, %v354
    %v371 = vsub.f32 %v304, %v355
    %v372 = vsub.f32 %v305, %v356
    %v373 = vsub.f32 %v306, %v357
    %v374 = vsub.f32 %v307, %v358
    %v375 = vsub.f32 %v308, %v359
    %v376 = vsub.f32 %v309, %v360
    %v377 = vsub.f32 %v310, %v361
    %v378 = vsub.f32 %v311, %v362
    %v379 = vsub.f32 %v312, %v363
    %v380 = vsub.f32 %v313, %v364
    %v381 = vsub.f32 %v314, %v365
    %v382 = vsel %vm317, %v366, 0.0
    %v383 = vsel %vm317, %v367, 0.0
    %v384 = vsel %vm317, %v368, 0.0
    %v385 = vsel %vm317, %v369, 0.0
    %v386 = vsel %vm317, %v370, 0.0
    %v387 = vsel %vm317, %v371, 0.0
    %v388 = vsel %vm317, %v372, 0.0
    %v389 = vsel %vm317, %v373, 0.0
    %v390 = vsel %vm317, %v374, 0.0
    %v391 = vsel %vm317, %v375, 0.0
    %v392 = vsel %vm317, %v376, 0.0
    %v393 = vsel %vm317, %v377, 0.0
    %v394 = vsel %vm317, %v378, 0.0
    %v395 = vsel %vm317, %v379, 0.0
    %v396 = vsel %vm317, %v380, 0.0
    %v397 = vsel %vm317, %v381, 0.0
    %v398 = vmul.f32 %v382, %v382
    %v399 = vmul.f32 %v383, %v383
    %v400 = vmul.f32 %v384, %v384
    %v401 = vmul.f32 %v385, %v385
    %v402 = vmul.f32 %v386, %v386
    %v403 = vmul.f32 %v387, %v387
    %v404 = vmul.f32 %v388, %v388
    %v405 = vmul.f32 %v389, %v389
    %v406 = vmul.f32 %v390, %v390
    %v407 = vmul.f32 %v391, %v391
    %v408 = vmul.f32 %v392, %v392
    %v409 = vmul.f32 %v393, %v393
    %v410 = vmul.f32 %v394, %v394
    %v411 = vmul.f32 %v395, %v395
    %v412 = vmul.f32 %v396, %v396
    %v413 = vmul.f32 %v397, %v397
    %414 = vadd.xlane.f32.xlu0 %v398
    %v415 = vpop.xlane.xlu0 %414
    %416 = vadd.xlane.f32.xlu0 %v399
    %v417 = vpop.xlane.xlu0 %416
    %418 = vadd.xlane.f32.xlu0 %v400
    %v419 = vpop.xlane.xlu0 %418
    %420 = vadd.xlane.f32.xlu0 %v401
    %v421 = vpop.xlane.xlu0 %420
    %422 = vadd.xlane.f32.xlu0 %v402
    %v423 = vpop.xlane.xlu0 %422
    %424 = vadd.xlane.f32.xlu0 %v403
    %v425 = vpop.xlane.xlu0 %424
    %426 = vadd.xlane.f32.xlu0 %v404
    %v427 = vpop.xlane.xlu0 %426
    %428 = vadd.xlane.f32.xlu0 %v405
    %v429 = vpop.xlane.xlu0 %428
    %430 = vadd.xlane.f32.xlu0 %v406
    %v431 = vpop.xlane.xlu0 %430
    %432 = vadd.xlane.f32.xlu0 %v407
    %v433 = vpop.xlane.xlu0 %432
    %434 = vadd.xlane.f32.xlu0 %v408
    %v435 = vpop.xlane.xlu0 %434
    %436 = vadd.xlane.f32.xlu0 %v409
    %v437 = vpop.xlane.xlu0 %436
    %438 = vadd.xlane.f32.xlu0 %v410
    %v439 = vpop.xlane.xlu0 %438
    %440 = vadd.xlane.f32.xlu0 %v411
    %v441 = vpop.xlane.xlu0 %440
    %442 = vadd.xlane.f32.xlu0 %v412
    %v443 = vpop.xlane.xlu0 %442
    %444 = vadd.xlane.f32.xlu0 %v413
    %v445 = vpop.xlane.xlu0 %444
    %v446 = vmul.f32 %v415, 0.015625
    %v447 = vmul.f32 %v417, 0.015625
    %v448 = vmul.f32 %v419, 0.015625
    %v449 = vmul.f32 %v421, 0.015625
    %v450 = vmul.f32 %v423, 0.015625
    %v451 = vmul.f32 %v425, 0.015625
    %v452 = vmul.f32 %v427, 0.015625
    %v453 = vmul.f32 %v429, 0.015625
    %v454 = vmul.f32 %v431, 0.015625
    %v455 = vmul.f32 %v433, 0.015625
    %v456 = vmul.f32 %v435, 0.015625
    %v457 = vmul.f32 %v437, 0.015625
    %v458 = vmul.f32 %v439, 0.015625
    %v459 = vmul.f32 %v441, 0.015625
    %v460 = vmul.f32 %v443, 0.015625
    %v461 = vmul.f32 %v445, 0.015625
    %v462 = vadd.f32 %v446, 1e-05
    %v463 = vadd.f32 %v447, 1e-05
    %v464 = vadd.f32 %v448, 1e-05
    %v465 = vadd.f32 %v449, 1e-05
    %v466 = vadd.f32 %v450, 1e-05
    %v467 = vadd.f32 %v451, 1e-05
    %v468 = vadd.f32 %v452, 1e-05
    %v469 = vadd.f32 %v453, 1e-05
    %v470 = vadd.f32 %v454, 1e-05
    %v471 = vadd.f32 %v455, 1e-05
    %v472 = vadd.f32 %v456, 1e-05
    %v473 = vadd.f32 %v457, 1e-05
    %v474 = vadd.f32 %v458, 1e-05
    %v475 = vadd.f32 %v459, 1e-05
    %v476 = vadd.f32 %v460, 1e-05
    %v477 = vadd.f32 %v461, 1e-05
    %v478 = vrsqrt.pop %v462
    %v479 = vmul.f32 %v478, %v462
    %v480 = vmul.f32 %v479, %v478
    %v481 = vmul.f32 0.5, %v480
    %v482 = vsub.f32 1.5, %v481
    %v483 = vmul.f32 %v478, %v482
    %vm484 = vweird.f32 %v462
    %vm485 = vweird.f32 %v478
    %vm486 = vmor %vm484, %vm485
    %v487 = vsel %vm486, %v478, %v483
    %v488 = vrsqrt.pop %v463
    %v489 = vmul.f32 %v488, %v463
    %v490 = vmul.f32 %v489, %v488
    %v491 = vmul.f32 0.5, %v490
    %v492 = vsub.f32 1.5, %v491
    %v493 = vmul.f32 %v488, %v492
    %vm494 = vweird.f32 %v463
    %vm495 = vweird.f32 %v488
    %vm496 = vmor %vm494, %vm495
    %v497 = vsel %vm496, %v488, %v493
    %v498 = vrsqrt.pop %v464
    %v499 = vmul.f32 %v498, %v464
    %v500 = vmul.f32 %v499, %v498
    %v501 = vmul.f32 0.5, %v500
    %v502 = vsub.f32 1.5, %v501
    %v503 = vmul.f32 %v498, %v502
    %vm504 = vweird.f32 %v464
    %vm505 = vweird.f32 %v498
    %vm506 = vmor %vm504, %vm505
    %v507 = vsel %vm506, %v498, %v503
    %v508 = vrsqrt.pop %v465
    %v509 = vmul.f32 %v508, %v465
    %v510 = vmul.f32 %v509, %v508
    %v511 = vmul.f32 0.5, %v510
    %v512 = vsub.f32 1.5, %v511
    %v513 = vmul.f32 %v508, %v512
    %vm514 = vweird.f32 %v465
    %vm515 = vweird.f32 %v508
    %vm516 = vmor %vm514, %vm515
    %v517 = vsel %vm516, %v508, %v513
    %v518 = vrsqrt.pop %v466
    %v519 = vmul.f32 %v518, %v466
    %v520 = vmul.f32 %v519, %v518
    %v521 = vmul.f32 0.5, %v520
    %v522 = vsub.f32 1.5, %v521
    %v523 = vmul.f32 %v518, %v522
    %vm524 = vweird.f32 %v466
    %vm525 = vweird.f32 %v518
    %vm526 = vmor %vm524, %vm525
    %v527 = vsel %vm526, %v518, %v523
    %v528 = vrsqrt.pop %v467
    %v529 = vmul.f32 %v528, %v467
    %v530 = vmul.f32 %v529, %v528
    %v531 = vmul.f32 0.5, %v530
    %v532 = vsub.f32 1.5, %v531
    %v533 = vmul.f32 %v528, %v532
    %vm534 = vweird.f32 %v467
    %vm535 = vweird.f32 %v528
    %vm536 = vmor %vm534, %vm535
    %v537 = vsel %vm536, %v528, %v533
    %v538 = vrsqrt.pop %v468
    %v539 = vmul.f32 %v538, %v468
    %v540 = vmul.f32 %v539, %v538
    %v541 = vmul.f32 0.5, %v540
    %v542 = vsub.f32 1.5, %v541
    %v543 = vmul.f32 %v538, %v542
    %vm544 = vweird.f32 %v468
    %vm545 = vweird.f32 %v538
    %vm546 = vmor %vm544, %vm545
    %v547 = vsel %vm546, %v538, %v543
    %v548 = vrsqrt.pop %v469
    %v549 = vmul.f32 %v548, %v469
    %v550 = vmul.f32 %v549, %v548
    %v551 = vmul.f32 0.5, %v550
    %v552 = vsub.f32 1.5, %v551
    %v553 = vmul.f32 %v548, %v552
    %vm554 = vweird.f32 %v469
    %vm555 = vweird.f32 %v548
    %vm556 = vmor %vm554, %vm555
    %v557 = vsel %vm556, %v548, %v553
    %v558 = vrsqrt.pop %v470
    %v559 = vmul.f32 %v558, %v470
    %v560 = vmul.f32 %v559, %v558
    %v561 = vmul.f32 0.5, %v560
    %v562 = vsub.f32 1.5, %v561
    %v563 = vmul.f32 %v558, %v562
    %vm564 = vweird.f32 %v470
    %vm565 = vweird.f32 %v558
    %vm566 = vmor %vm564, %vm565
    %v567 = vsel %vm566, %v558, %v563
    %v568 = vrsqrt.pop %v471
    %v569 = vmul.f32 %v568, %v471
    %v570 = vmul.f32 %v569, %v568
    %v571 = vmul.f32 0.5, %v570
    %v572 = vsub.f32 1.5, %v571
    %v573 = vmul.f32 %v568, %v572
    %vm574 = vweird.f32 %v471
    %vm575 = vweird.f32 %v568
    %vm576 = vmor %vm574, %vm575
    %v577 = vsel %vm576, %v568, %v573
    %v578 = vrsqrt.pop %v472
    %v579 = vmul.f32 %v578, %v472
    %v580 = vmul.f32 %v579, %v578
    %v581 = vmul.f32 0.5, %v580
    %v582 = vsub.f32 1.5, %v581
    %v583 = vmul.f32 %v578, %v582
    %vm584 = vweird.f32 %v472
    %vm585 = vweird.f32 %v578
    %vm586 = vmor %vm584, %vm585
    %v587 = vsel %vm586, %v578, %v583
    %v588 = vrsqrt.pop %v473
    %v589 = vmul.f32 %v588, %v473
    %v590 = vmul.f32 %v589, %v588
    %v591 = vmul.f32 0.5, %v590
    %v592 = vsub.f32 1.5, %v591
    %v593 = vmul.f32 %v588, %v592
    %vm594 = vweird.f32 %v473
    %vm595 = vweird.f32 %v588
    %vm596 = vmor %vm594, %vm595
    %v597 = vsel %vm596, %v588, %v593
    %v598 = vrsqrt.pop %v474
    %v599 = vmul.f32 %v598, %v474
    %v600 = vmul.f32 %v599, %v598
    %v601 = vmul.f32 0.5, %v600
    %v602 = vsub.f32 1.5, %v601
    %v603 = vmul.f32 %v598, %v602
    %vm604 = vweird.f32 %v474
    %vm605 = vweird.f32 %v598
    %vm606 = vmor %vm604, %vm605
    %v607 = vsel %vm606, %v598, %v603
    %v608 = vrsqrt.pop %v475
    %v609 = vmul.f32 %v608, %v475
    %v610 = vmul.f32 %v609, %v608
    %v611 = vmul.f32 0.5, %v610
    %v612 = vsub.f32 1.5, %v611
    %v613 = vmul.f32 %v608, %v612
    %vm614 = vweird.f32 %v475
    %vm615 = vweird.f32 %v608
    %vm616 = vmor %vm614, %vm615
    %v617 = vsel %vm616, %v608, %v613
    %v618 = vrsqrt.pop %v476
    %v619 = vmul.f32 %v618, %v476
    %v620 = vmul.f32 %v619, %v618
    %v621 = vmul.f32 0.5, %v620
    %v622 = vsub.f32 1.5, %v621
    %v623 = vmul.f32 %v618, %v622
    %vm624 = vweird.f32 %v476
    %vm625 = vweird.f32 %v618
    %vm626 = vmor %vm624, %vm625
    %v627 = vsel %vm626, %v618, %v623
    %v628 = vrsqrt.pop %v477
    %v629 = vmul.f32 %v628, %v477
    %v630 = vmul.f32 %v629, %v628
    %v631 = vmul.f32 0.5, %v630
    %v632 = vsub.f32 1.5, %v631
    %v633 = vmul.f32 %v628, %v632
    %vm634 = vweird.f32 %v477
    %vm635 = vweird.f32 %v628
    %vm636 = vmor %vm634, %vm635
    %v637 = vsel %vm636, %v628, %v633
    %v638 = vmul.f32 %v382, %v487
    %v639 = vmul.f32 %v383, %v497
    %v640 = vmul.f32 %v384, %v507
    %v641 = vmul.f32 %v385, %v517
    %v642 = vmul.f32 %v386, %v527
    %v643 = vmul.f32 %v387, %v537
    %v644 = vmul.f32 %v388, %v547
    %v645 = vmul.f32 %v389, %v557
    %v646 = vmul.f32 %v390, %v567
    %v647 = vmul.f32 %v391, %v577
    %v648 = vmul.f32 %v392, %v587
    %v649 = vmul.f32 %v393, %v597
    %v650 = vmul.f32 %v394, %v607
    %v651 = vmul.f32 %v395, %v617
    %v652 = vmul.f32 %v396, %v627
    %v653 = vmul.f32 %v397, %v637
    %v654 = vld [vmem:[%s3] sm:$0x1]
    %v656 = vperm.slane %v654, 0
    %v658 = vmul.f32 %v638, %v656
    %v659 = vmul.f32 %v639, %v656
    %v660 = vmul.f32 %v640, %v656
    %v661 = vmul.f32 %v641, %v656
    %v662 = vmul.f32 %v642, %v656
    %v663 = vmul.f32 %v643, %v656
    %v664 = vmul.f32 %v644, %v656
    %v665 = vmul.f32 %v645, %v656
    %v666 = vmul.f32 %v646, %v656
    %v667 = vmul.f32 %v647, %v656
    %v668 = vmul.f32 %v648, %v656
    %v669 = vmul.f32 %v649, %v656
    %v670 = vmul.f32 %v650, %v656
    %v671 = vmul.f32 %v651, %v656
    %v672 = vmul.f32 %v652, %v656
    %v673 = vmul.f32 %v653, %v656
    %v674 = vld [vmem:[%s4] sm:$0x1]
    %v676 = vperm.slane %v674, 0
    %v678 = vadd.f32 %v658, %v676
    %v679 = vadd.f32 %v659, %v676
    %v680 = vadd.f32 %v660, %v676
    %v681 = vadd.f32 %v661, %v676
    %v682 = vadd.f32 %v662, %v676
    %v683 = vadd.f32 %v663, %v676
    %v684 = vadd.f32 %v664, %v676
    %v685 = vadd.f32 %v665, %v676
    %v686 = vadd.f32 %v666, %v676
    %v687 = vadd.f32 %v667, %v676
    %v688 = vadd.f32 %v668, %v676
    %v689 = vadd.f32 %v669, %v676
    %v690 = vadd.f32 %v670, %v676
    %v691 = vadd.f32 %v671, %v676
    %v692 = vadd.f32 %v672, %v676
    %v693 = vadd.f32 %v673, %v676
    %vm694 = vcmp.gt.f32.partialorder %v678, 0.0
    %vm695 = vcmp.gt.f32.partialorder %v679, 0.0
    %vm696 = vcmp.gt.f32.partialorder %v680, 0.0
    %vm697 = vcmp.gt.f32.partialorder %v681, 0.0
    %vm698 = vcmp.gt.f32.partialorder %v682, 0.0
    %vm699 = vcmp.gt.f32.partialorder %v683, 0.0
    %vm700 = vcmp.gt.f32.partialorder %v684, 0.0
    %vm701 = vcmp.gt.f32.partialorder %v685, 0.0
    %vm702 = vcmp.gt.f32.partialorder %v686, 0.0
    %vm703 = vcmp.gt.f32.partialorder %v687, 0.0
    %vm704 = vcmp.gt.f32.partialorder %v688, 0.0
    %vm705 = vcmp.gt.f32.partialorder %v689, 0.0
    %vm706 = vcmp.gt.f32.partialorder %v690, 0.0
    %vm707 = vcmp.gt.f32.partialorder %v691, 0.0
    %vm708 = vcmp.gt.f32.partialorder %v692, 0.0
    %vm709 = vcmp.gt.f32.partialorder %v693, 0.0
    %v710 = vmul.f32 %v678, 0.01
    %v711 = vmul.f32 %v679, 0.01
    %v712 = vmul.f32 %v680, 0.01
    %v713 = vmul.f32 %v681, 0.01
    %v714 = vmul.f32 %v682, 0.01
    %v715 = vmul.f32 %v683, 0.01
    %v716 = vmul.f32 %v684, 0.01
    %v717 = vmul.f32 %v685, 0.01
    %v718 = vmul.f32 %v686, 0.01
    %v719 = vmul.f32 %v687, 0.01
    %v720 = vmul.f32 %v688, 0.01
    %v721 = vmul.f32 %v689, 0.01
    %v722 = vmul.f32 %v690, 0.01
    %v723 = vmul.f32 %v691, 0.01
    %v724 = vmul.f32 %v692, 0.01
    %v725 = vmul.f32 %v693, 0.01
    %v726 = vsel %vm694, %v678, %v710
    %v727 = vsel %vm695, %v679, %v711
    %v728 = vsel %vm696, %v680, %v712
    %v729 = vsel %vm697, %v681, %v713
    %v730 = vsel %vm698, %v682, %v714
    %v731 = vsel %vm699, %v683, %v715
    %v732 = vsel %vm700, %v684, %v716
    %v733 = vsel %vm701, %v685, %v717
    %v734 = vsel %vm702, %v686, %v718
    %v735 = vsel %vm703, %v687, %v719
    %v736 = vsel %vm704, %v688, %v720
    %v737 = vsel %vm705, %v689, %v721
    %v738 = vsel %vm706, %v690, %v722
    %v739 = vsel %vm707, %v691, %v723
    %v740 = vsel %vm708, %v692, %v724
    %v741 = vsel %vm709, %v693, %v725
    %v742 = vpack.c.bf16 %v727, %v726
    %v743 = vpack.c.bf16 %v729, %v728
    %v744 = vpack.c.bf16 %v731, %v730
    %v745 = vpack.c.bf16 %v733, %v732
    %v746 = vpack.c.bf16 %v735, %v734
    %v747 = vpack.c.bf16 %v737, %v736
    %v748 = vpack.c.bf16 %v739, %v738
    %v749 = vpack.c.bf16 %v741, %v740
    %v750 = vld [vmem:[%s5] sm:$0xf]
    %v751 = vld [vmem:[%s5 + $0x4] sm:$0xf]
    %v752 = vld [vmem:[%s5 + $0x8] sm:$0xf]
    %v753 = vld [vmem:[%s5 + $0xc] sm:$0xf]
    %v754 = vld [vmem:[%s5 + $0x10] sm:$0xf]
    %v755 = vld [vmem:[%s5 + $0x14] sm:$0xf]
    %v756 = vld [vmem:[%s5 + $0x18] sm:$0xf]
    %v757 = vld [vmem:[%s5 + $0x1c] sm:$0xf]
    %v758 = vld [vmem:[%s5 + $0x20] sm:$0xf]
    %v759 = vld [vmem:[%s5 + $0x24] sm:$0xf]
    %v760 = vld [vmem:[%s5 + $0x28] sm:$0xf]
    %v761 = vld [vmem:[%s5 + $0x2c] sm:$0xf]
    %v762 = vld [vmem:[%s5 + $0x30] sm:$0xf]
    %v763 = vld [vmem:[%s5 + $0x34] sm:$0xf]
    %v764 = vld [vmem:[%s5 + $0x38] sm:$0xf]
    %v765 = vld [vmem:[%s5 + $0x3c] sm:$0xf]
    %v766 = vld [vmem:[%s6] sm:$0x1]
    %v768 = vperm.slane %v766, 0
    %v786 = vunpack.c.l.b16 %v750
    %v787 = vunpack.c.l.b16 %v751
    %v788 = vunpack.c.l.b16 %v752
    %v789 = vunpack.c.l.b16 %v753
    %v790 = vunpack.c.l.b16 %v754
    %v791 = vunpack.c.l.b16 %v755
    %v792 = vunpack.c.l.b16 %v756
    %v793 = vunpack.c.l.b16 %v757
    %v794 = vunpack.c.l.b16 %v758
    %v795 = vunpack.c.l.b16 %v759
    %v796 = vunpack.c.l.b16 %v760
    %v797 = vunpack.c.l.b16 %v761
    %v798 = vunpack.c.l.b16 %v762
    %v799 = vunpack.c.l.b16 %v763
    %v800 = vunpack.c.l.b16 %v764
    %v801 = vunpack.c.l.b16 %v765
    %v802 = vpack.c.b16 %v787, %v786
    %v803 = vpack.c.b16 %v789, %v788
    %v804 = vpack.c.b16 %v791, %v790
    %v805 = vpack.c.b16 %v793, %v792
    %v806 = vpack.c.b16 %v795, %v794
    %v807 = vpack.c.b16 %v797, %v796
    %v808 = vpack.c.b16 %v799, %v798
    %v809 = vpack.c.b16 %v801, %v800
    %818 = vmatpush.bf16.msra.mxu0 %v809
    %819 = vmatpush.bf16.msra.mxu0 %v808
    %820 = vmatpush.bf16.msra.mxu0 %v807
    %821 = vmatpush.bf16.msra.mxu0 %v806
    %822 = vmatpush.bf16.msra.mxu0 %v805
    %823 = vmatpush.bf16.msra.mxu0 %v804
    %824 = vmatpush.bf16.msra.mxu0 %v803
    %825 = vmatpush.bf16.msra.mxu0 %v802
    %826 = vmatmul.bf16.gmra.mxu0 %v742
    %v827 = vpop.f32.mrf.mxu0
    %v828 = vadd.f32 %v768, %v827
    %v829 = vpop.f32.mrf.mxu0
    %v830 = vadd.f32 %v768, %v829
    %831 = vmatmul.bf16.gmra.mxu0 %v743
    %v832 = vpop.f32.mrf.mxu0
    %v833 = vadd.f32 %v768, %v832
    %v834 = vpop.f32.mrf.mxu0
    %v835 = vadd.f32 %v768, %v834
    %836 = vmatmul.bf16.gmra.mxu0 %v744
    %v837 = vpop.f32.mrf.mxu0
    %v838 = vadd.f32 %v768, %v837
    %v839 = vpop.f32.mrf.mxu0
    %v840 = vadd.f32 %v768, %v839
    %841 = vmatmul.bf16.gmra.mxu0 %v745
    %v842 = vpop.f32.mrf.mxu0
    %v843 = vadd.f32 %v768, %v842
    %v844 = vpop.f32.mrf.mxu0
    %v845 = vadd.f32 %v768, %v844
    %846 = vmatmul.bf16.gmra.mxu0 %v746
    %v847 = vpop.f32.mrf.mxu0
    %v848 = vadd.f32 %v768, %v847
    %v849 = vpop.f32.mrf.mxu0
    %v850 = vadd.f32 %v768, %v849
    %851 = vmatmul.bf16.gmra.mxu0 %v747
    %v852 = vpop.f32.mrf.mxu0
    %v853 = vadd.f32 %v768, %v852
    %v854 = vpop.f32.mrf.mxu0
    %v855 = vadd.f32 %v768, %v854
    %856 = vmatmul.bf16.gmra.mxu0 %v748
    %v857 = vpop.f32.mrf.mxu0
    %v858 = vadd.f32 %v768, %v857
    %v859 = vpop.f32.mrf.mxu0
    %v860 = vadd.f32 %v768, %v859
    %861 = vmatmul.bf16.gmra.mxu0 %v749
    %v862 = vpop.f32.mrf.mxu0
    %v863 = vadd.f32 %v768, %v862
    %v864 = vpop.f32.mrf.mxu0
    %v865 = vadd.f32 %v768, %v864
    %866 = vdwg.mxu0
    %v867 = vpack.c.bf16 %v828, %v828
    %v868 = vpack.c.bf16 %v830, %v830
    %v869 = vpack.c.bf16 %v833, %v833
    %v870 = vpack.c.bf16 %v835, %v835
    %v871 = vpack.c.bf16 %v838, %v838
    %v872 = vpack.c.bf16 %v840, %v840
    %v873 = vpack.c.bf16 %v843, %v843
    %v874 = vpack.c.bf16 %v845, %v845
    %v875 = vpack.c.bf16 %v848, %v848
    %v876 = vpack.c.bf16 %v850, %v850
    %v877 = vpack.c.bf16 %v853, %v853
    %v878 = vpack.c.bf16 %v855, %v855
    %v879 = vpack.c.bf16 %v858, %v858
    %v880 = vpack.c.bf16 %v860, %v860
    %v881 = vpack.c.bf16 %v863, %v863
    %v882 = vpack.c.bf16 %v865, %v865
    %883 = vst [vmem:[%s7] sm:$0xf] %v867
    %884 = vst [vmem:[%s7 + $0x4] sm:$0xf] %v868
    %885 = vst [vmem:[%s7 + $0x8] sm:$0xf] %v869
    %886 = vst [vmem:[%s7 + $0xc] sm:$0xf] %v870
    %887 = vst [vmem:[%s7 + $0x10] sm:$0xf] %v871
    %888 = vst [vmem:[%s7 + $0x14] sm:$0xf] %v872
    %889 = vst [vmem:[%s7 + $0x18] sm:$0xf] %v873
    %890 = vst [vmem:[%s7 + $0x1c] sm:$0xf] %v874
    %891 = vst [vmem:[%s7 + $0x20] sm:$0xf] %v875
    %892 = vst [vmem:[%s7 + $0x24] sm:$0xf] %v876
    %893 = vst [vmem:[%s7 + $0x28] sm:$0xf] %v877
    %894 = vst [vmem:[%s7 + $0x2c] sm:$0xf] %v878
    %895 = vst [vmem:[%s7 + $0x30] sm:$0xf] %v879
    %896 = vst [vmem:[%s7 + $0x34] sm:$0xf] %v880
    %897 = vst [vmem:[%s7 + $0x38] sm:$0xf] %v881
    %898 = vst [vmem:[%s7 + $0x3c] sm:$0xf] %v882
  $region37: #{gcn_layer.4} parent=0 // pred_fallthru
    _
  // Predicated region
  $region38: #{gcn_layer.4} parent=0 // pred_check
    _
  $region39: #{gcn_layer.4} parent=0 // pred_check_branch
    %900 = sbr.rel (0) target = $region41
  $region40: #{gcn_layer.4} parent=0 // pred_region
    _
  $region41: #{gcn_layer.4} parent=0 // pred_fallthru
    _
  // Predicated region
  $region42: #{gcn_layer.4} parent=0 // pred_check
    _
  $region43: #{gcn_layer.4} parent=0 // pred_check_branch
    %902 = sbr.rel (0) target = $region45
  $region44: #{gcn_layer.4} parent=0 // pred_region
    _
  $region45: #{gcn_layer.4} parent=0 // pred_fallthru
    _

// kernel: gcn_layer.5
$region0: #{gcn_layer.5}
  #allocation0 [shape = 'u32[]', space=smem, size = 0x4, offset = 0x4, fixed_abs, tag = 'smem constant byte address 0x4 - core index']
  #allocation1 [shape = 'u32[72,128]{1,0:T(1,128)}', space=vmem, size = 0x9000, scoped, tag = 'internal scratch']
  #allocation2 [shape = 'f32[128,128]{1,0:T(8,128)}', space=vmem, size = 0x10000, scoped, tag = 'scratch operand']
  %s0 = inlined_call_operand.vmem [shape: bf16[128,128], index: 0, kind: input, shape index: {}]
  %s1 = inlined_call_operand.vmem [shape: bf16[128,128], index: 1, kind: input, shape index: {}]
  %s2 = inlined_call_operand.vmem [shape: f32[1,128], index: 2, kind: input, shape index: {}]
  %s3 = inlined_call_operand.vmem [shape: f32[1,128], index: 3, kind: input, shape index: {}]
  %s4 = inlined_call_operand.vmem [shape: f32[1,128], index: 4, kind: input, shape index: {}]
  %s5 = inlined_call_operand.vmem [shape: bf16[128,128], index: 5, kind: input, shape index: {}]
  %s6 = inlined_call_operand.vmem [shape: f32[1,128], index: 6, kind: input, shape index: {}]
  %s7 = inlined_call_operand.vmem [shape: f32[128,128], index: 7, kind: output, shape index: {}]
  %s8 = sld [smem:[#allocation0]]
  $region46: #{gcn_layer.5} parent=0
    _
  %s10 = ssub.s32 1, %s8
  %s11 = scalar_select 0, %s10, %s8
  // Predicated region
  $region2: #{gcn_layer.5} parent=0 // pred_check
    _
  $region3: #{gcn_layer.5} parent=0 // pred_check_branch
    %13 = sbr.rel (0) target = $region5
  $region4: #{gcn_layer.5} parent=0 // pred_region
    _
  $region5: #{gcn_layer.5} parent=0 // pred_fallthru
    _
  // Predicated region
  $region6: #{gcn_layer.5} parent=0 // pred_check
    _
  $region7: #{gcn_layer.5} parent=0 // pred_check_branch
    %15 = sbr.rel (0) target = $region9
  $region8: #{gcn_layer.5} parent=0 // pred_region
    _
  $region9: #{gcn_layer.5} parent=0 // pred_fallthru
    _
  // Predicated region
  $region10: #{gcn_layer.5} parent=0 // pred_check
    _
  $region11: #{gcn_layer.5} parent=0 // pred_check_branch
    %17 = sbr.rel (0) target = $region13
  $region12: #{gcn_layer.5} parent=0 // pred_region
    _
  $region13: #{gcn_layer.5} parent=0 // pred_fallthru
    _
  // Predicated region
  $region14: #{gcn_layer.5} parent=0 // pred_check
    _
  $region15: #{gcn_layer.5} parent=0 // pred_check_branch
    %19 = sbr.rel (0) target = $region17
  $region16: #{gcn_layer.5} parent=0 // pred_region
    _
  $region17: #{gcn_layer.5} parent=0 // pred_fallthru
    _
  // Predicated region
  $region18: #{gcn_layer.5} parent=0 // pred_check
    _
  $region19: #{gcn_layer.5} parent=0 // pred_check_branch
    %21 = sbr.rel (0) target = $region21
  $region20: #{gcn_layer.5} parent=0 // pred_region
    _
  $region21: #{gcn_layer.5} parent=0 // pred_fallthru
    _
  // Predicated region
  $region22: #{gcn_layer.5} parent=0 // pred_check
    _
  $region23: #{gcn_layer.5} parent=0 // pred_check_branch
    %23 = sbr.rel (0) target = $region25
  $region24: #{gcn_layer.5} parent=0 // pred_region
    _
  $region25: #{gcn_layer.5} parent=0 // pred_fallthru
    _
  // Predicated region
  $region26: #{gcn_layer.5} parent=0 // pred_check
    _
  $region27: #{gcn_layer.5} parent=0 // pred_check_branch
    %25 = sbr.rel (0) target = $region29
  $region28: #{gcn_layer.5} parent=0 // pred_region
    _
  $region29: #{gcn_layer.5} parent=0 // pred_fallthru
    _
  %p26 = scmp.eq.s32.totalorder 0, 0
  // Predicated region
  $region30: #{gcn_layer.5} parent=0 // pred_check
    %p27 = pneg %p26
  $region31: #{gcn_layer.5} parent=0 // pred_check_branch
    %29 = sbr.rel (%p27) target = $region33
  $region32: #{gcn_layer.5} parent=0 // pred_region
    %30 = vst [vmem:[#allocation2] sm:$0xff] 0.0
    %31 = vst [vmem:[#allocation2 + $0x8] sm:$0xff] 0.0
    %32 = vst [vmem:[#allocation2 + $0x10] sm:$0xff] 0.0
    %33 = vst [vmem:[#allocation2 + $0x18] sm:$0xff] 0.0
    %34 = vst [vmem:[#allocation2 + $0x20] sm:$0xff] 0.0
    %35 = vst [vmem:[#allocation2 + $0x28] sm:$0xff] 0.0
    %36 = vst [vmem:[#allocation2 + $0x30] sm:$0xff] 0.0
    %37 = vst [vmem:[#allocation2 + $0x38] sm:$0xff] 0.0
    %38 = vst [vmem:[#allocation2 + $0x40] sm:$0xff] 0.0
    %39 = vst [vmem:[#allocation2 + $0x48] sm:$0xff] 0.0
    %40 = vst [vmem:[#allocation2 + $0x50] sm:$0xff] 0.0
    %41 = vst [vmem:[#allocation2 + $0x58] sm:$0xff] 0.0
    %42 = vst [vmem:[#allocation2 + $0x60] sm:$0xff] 0.0
    %43 = vst [vmem:[#allocation2 + $0x68] sm:$0xff] 0.0
    %44 = vst [vmem:[#allocation2 + $0x70] sm:$0xff] 0.0
    %45 = vst [vmem:[#allocation2 + $0x78] sm:$0xff] 0.0
  $region33: #{gcn_layer.5} parent=0 // pred_fallthru
    _
  %s46 = smul.u32 0, 128
  %s47 = sshra.s32 %s46, 3
  %s48 = sand.u32 %s46, 7
  %s49 = smul.addr %s47, 4
  %s50 = scalar_lea.vmem %s1, %s49
  %v51 = vld [vmem:[%s50] sm:$0xf]
  %v52 = vld [vmem:[%s50 + $0x4] sm:$0xf]
  %v53 = vld [vmem:[%s50 + $0x8] sm:$0xf]
  %v54 = vld [vmem:[%s50 + $0xc] sm:$0xf]
  %v55 = vld [vmem:[%s50 + $0x10] sm:$0xf]
  %v56 = vld [vmem:[%s50 + $0x14] sm:$0xf]
  %v57 = vld [vmem:[%s50 + $0x18] sm:$0xf]
  %v58 = vld [vmem:[%s50 + $0x1c] sm:$0xf]
  %v59 = vld [vmem:[%s50 + $0x20] sm:$0xf]
  %v60 = vld [vmem:[%s50 + $0x24] sm:$0xf]
  %v61 = vld [vmem:[%s50 + $0x28] sm:$0xf]
  %v62 = vld [vmem:[%s50 + $0x2c] sm:$0xf]
  %v63 = vld [vmem:[%s50 + $0x30] sm:$0xf]
  %v64 = vld [vmem:[%s50 + $0x34] sm:$0xf]
  %v65 = vld [vmem:[%s50 + $0x38] sm:$0xf]
  %v66 = vld [vmem:[%s50 + $0x3c] sm:$0xf]
  %v67 = vld [vmem:[#allocation2] sm:$0xff]
  %v68 = vld [vmem:[#allocation2 + $0x8] sm:$0xff]
  %v69 = vld [vmem:[#allocation2 + $0x10] sm:$0xff]
  %v70 = vld [vmem:[#allocation2 + $0x18] sm:$0xff]
  %v71 = vld [vmem:[#allocation2 + $0x20] sm:$0xff]
  %v72 = vld [vmem:[#allocation2 + $0x28] sm:$0xff]
  %v73 = vld [vmem:[#allocation2 + $0x30] sm:$0xff]
  %v74 = vld [vmem:[#allocation2 + $0x38] sm:$0xff]
  %v75 = vld [vmem:[#allocation2 + $0x40] sm:$0xff]
  %v76 = vld [vmem:[#allocation2 + $0x48] sm:$0xff]
  %v77 = vld [vmem:[#allocation2 + $0x50] sm:$0xff]
  %v78 = vld [vmem:[#allocation2 + $0x58] sm:$0xff]
  %v79 = vld [vmem:[#allocation2 + $0x60] sm:$0xff]
  %v80 = vld [vmem:[#allocation2 + $0x68] sm:$0xff]
  %v81 = vld [vmem:[#allocation2 + $0x70] sm:$0xff]
  %v82 = vld [vmem:[#allocation2 + $0x78] sm:$0xff]
  %v83 = vld [vmem:[%s0] sm:$0xf]
  %v84 = vld [vmem:[%s0 + $0x4] sm:$0xf]
  %v85 = vld [vmem:[%s0 + $0x8] sm:$0xf]
  %v86 = vld [vmem:[%s0 + $0xc] sm:$0xf]
  %v87 = vld [vmem:[%s0 + $0x10] sm:$0xf]
  %v88 = vld [vmem:[%s0 + $0x14] sm:$0xf]
  %v89 = vld [vmem:[%s0 + $0x18] sm:$0xf]
  %v90 = vld [vmem:[%s0 + $0x1c] sm:$0xf]
  %v91 = vld [vmem:[%s0 + $0x20] sm:$0xf]
  %v92 = vld [vmem:[%s0 + $0x24] sm:$0xf]
  %v93 = vld [vmem:[%s0 + $0x28] sm:$0xf]
  %v94 = vld [vmem:[%s0 + $0x2c] sm:$0xf]
  %v95 = vld [vmem:[%s0 + $0x30] sm:$0xf]
  %v96 = vld [vmem:[%s0 + $0x34] sm:$0xf]
  %v97 = vld [vmem:[%s0 + $0x38] sm:$0xf]
  %v98 = vld [vmem:[%s0 + $0x3c] sm:$0xf]
  %v115 = vunpack.c.l.b16 %v83
  %v116 = vunpack.c.l.b16 %v84
  %v117 = vunpack.c.l.b16 %v85
  %v118 = vunpack.c.l.b16 %v86
  %v119 = vunpack.c.l.b16 %v87
  %v120 = vunpack.c.l.b16 %v88
  %v121 = vunpack.c.l.b16 %v89
  %v122 = vunpack.c.l.b16 %v90
  %v123 = vunpack.c.l.b16 %v91
  %v124 = vunpack.c.l.b16 %v92
  %v125 = vunpack.c.l.b16 %v93
  %v126 = vunpack.c.l.b16 %v94
  %v127 = vunpack.c.l.b16 %v95
  %v128 = vunpack.c.l.b16 %v96
  %v129 = vunpack.c.l.b16 %v97
  %v130 = vunpack.c.l.b16 %v98
  %v131 = vpack.c.b16 %v116, %v115
  %v132 = vpack.c.b16 %v118, %v117
  %v133 = vpack.c.b16 %v120, %v119
  %v134 = vpack.c.b16 %v122, %v121
  %v135 = vpack.c.b16 %v124, %v123
  %v136 = vpack.c.b16 %v126, %v125
  %v137 = vpack.c.b16 %v128, %v127
  %v138 = vpack.c.b16 %v130, %v129
  %v163 = vunpack.c.l.b16 %v51
  %v164 = vunpack.c.l.b16 %v52
  %v165 = vunpack.c.l.b16 %v53
  %v166 = vunpack.c.l.b16 %v54
  %v167 = vunpack.c.l.b16 %v55
  %v168 = vunpack.c.l.b16 %v56
  %v169 = vunpack.c.l.b16 %v57
  %v170 = vunpack.c.l.b16 %v58
  %v171 = vunpack.c.l.b16 %v59
  %v172 = vunpack.c.l.b16 %v60
  %v173 = vunpack.c.l.b16 %v61
  %v174 = vunpack.c.l.b16 %v62
  %v175 = vunpack.c.l.b16 %v63
  %v176 = vunpack.c.l.b16 %v64
  %v177 = vunpack.c.l.b16 %v65
  %v178 = vunpack.c.l.b16 %v66
  %v179 = vpack.c.b16 %v164, %v163
  %v180 = vpack.c.b16 %v166, %v165
  %v181 = vpack.c.b16 %v168, %v167
  %v182 = vpack.c.b16 %v170, %v169
  %v183 = vpack.c.b16 %v172, %v171
  %v184 = vpack.c.b16 %v174, %v173
  %v185 = vpack.c.b16 %v176, %v175
  %v186 = vpack.c.b16 %v178, %v177
  %195 = vmatpush.bf16.msra.mxu0 %v186
  %196 = vmatpush.bf16.msra.mxu0 %v185
  %197 = vmatpush.bf16.msra.mxu0 %v184
  %198 = vmatpush.bf16.msra.mxu0 %v183
  %199 = vmatpush.bf16.msra.mxu0 %v182
  %200 = vmatpush.bf16.msra.mxu0 %v181
  %201 = vmatpush.bf16.msra.mxu0 %v180
  %202 = vmatpush.bf16.msra.mxu0 %v179
  %203 = vmatmul.bf16.gmra.mxu0 %v131
  %v204 = vpop.f32.mrf.mxu0
  %v205 = vadd.f32 0.0, %v204
  %v206 = vpop.f32.mrf.mxu0
  %v207 = vadd.f32 0.0, %v206
  %208 = vmatmul.bf16.gmra.mxu0 %v132
  %v209 = vpop.f32.mrf.mxu0
  %v210 = vadd.f32 0.0, %v209
  %v211 = vpop.f32.mrf.mxu0
  %v212 = vadd.f32 0.0, %v211
  %213 = vmatmul.bf16.gmra.mxu0 %v133
  %v214 = vpop.f32.mrf.mxu0
  %v215 = vadd.f32 0.0, %v214
  %v216 = vpop.f32.mrf.mxu0
  %v217 = vadd.f32 0.0, %v216
  %218 = vmatmul.bf16.gmra.mxu0 %v134
  %v219 = vpop.f32.mrf.mxu0
  %v220 = vadd.f32 0.0, %v219
  %v221 = vpop.f32.mrf.mxu0
  %v222 = vadd.f32 0.0, %v221
  %223 = vmatmul.bf16.gmra.mxu0 %v135
  %v224 = vpop.f32.mrf.mxu0
  %v225 = vadd.f32 0.0, %v224
  %v226 = vpop.f32.mrf.mxu0
  %v227 = vadd.f32 0.0, %v226
  %228 = vmatmul.bf16.gmra.mxu0 %v136
  %v229 = vpop.f32.mrf.mxu0
  %v230 = vadd.f32 0.0, %v229
  %v231 = vpop.f32.mrf.mxu0
  %v232 = vadd.f32 0.0, %v231
  %233 = vmatmul.bf16.gmra.mxu0 %v137
  %v234 = vpop.f32.mrf.mxu0
  %v235 = vadd.f32 0.0, %v234
  %v236 = vpop.f32.mrf.mxu0
  %v237 = vadd.f32 0.0, %v236
  %238 = vmatmul.bf16.gmra.mxu0 %v138
  %v239 = vpop.f32.mrf.mxu0
  %v240 = vadd.f32 0.0, %v239
  %v241 = vpop.f32.mrf.mxu0
  %v242 = vadd.f32 0.0, %v241
  %243 = vdwg.mxu0
  %v244 = vadd.f32 %v67, %v205
  %v245 = vadd.f32 %v68, %v207
  %v246 = vadd.f32 %v69, %v210
  %v247 = vadd.f32 %v70, %v212
  %v248 = vadd.f32 %v71, %v215
  %v249 = vadd.f32 %v72, %v217
  %v250 = vadd.f32 %v73, %v220
  %v251 = vadd.f32 %v74, %v222
  %v252 = vadd.f32 %v75, %v225
  %v253 = vadd.f32 %v76, %v227
  %v254 = vadd.f32 %v77, %v230
  %v255 = vadd.f32 %v78, %v232
  %v256 = vadd.f32 %v79, %v235
  %v257 = vadd.f32 %v80, %v237
  %v258 = vadd.f32 %v81, %v240
  %v259 = vadd.f32 %v82, %v242
  %260 = vst [vmem:[#allocation2] sm:$0xff] %v244
  %261 = vst [vmem:[#allocation2 + $0x8] sm:$0xff] %v245
  %262 = vst [vmem:[#allocation2 + $0x10] sm:$0xff] %v246
  %263 = vst [vmem:[#allocation2 + $0x18] sm:$0xff] %v247
  %264 = vst [vmem:[#allocation2 + $0x20] sm:$0xff] %v248
  %265 = vst [vmem:[#allocation2 + $0x28] sm:$0xff] %v249
  %266 = vst [vmem:[#allocation2 + $0x30] sm:$0xff] %v250
  %267 = vst [vmem:[#allocation2 + $0x38] sm:$0xff] %v251
  %268 = vst [vmem:[#allocation2 + $0x40] sm:$0xff] %v252
  %269 = vst [vmem:[#allocation2 + $0x48] sm:$0xff] %v253
  %270 = vst [vmem:[#allocation2 + $0x50] sm:$0xff] %v254
  %271 = vst [vmem:[#allocation2 + $0x58] sm:$0xff] %v255
  %272 = vst [vmem:[#allocation2 + $0x60] sm:$0xff] %v256
  %273 = vst [vmem:[#allocation2 + $0x68] sm:$0xff] %v257
  %274 = vst [vmem:[#allocation2 + $0x70] sm:$0xff] %v258
  %275 = vst [vmem:[#allocation2 + $0x78] sm:$0xff] %v259
  // Predicated region
  $region34: #{gcn_layer.5} parent=0 // pred_check
    %p276 = pneg %p26
  $region35: #{gcn_layer.5} parent=0 // pred_check_branch
    %278 = sbr.rel (%p276) target = $region37
  $region36: #{gcn_layer.5} parent=0 // pred_region
    %v279 = vld [vmem:[#allocation2] sm:$0xff]
    %v280 = vld [vmem:[#allocation2 + $0x8] sm:$0xff]
    %v281 = vld [vmem:[#allocation2 + $0x10] sm:$0xff]
    %v282 = vld [vmem:[#allocation2 + $0x18] sm:$0xff]
    %v283 = vld [vmem:[#allocation2 + $0x20] sm:$0xff]
    %v284 = vld [vmem:[#allocation2 + $0x28] sm:$0xff]
    %v285 = vld [vmem:[#allocation2 + $0x30] sm:$0xff]
    %v286 = vld [vmem:[#allocation2 + $0x38] sm:$0xff]
    %v287 = vld [vmem:[#allocation2 + $0x40] sm:$0xff]
    %v288 = vld [vmem:[#allocation2 + $0x48] sm:$0xff]
    %v289 = vld [vmem:[#allocation2 + $0x50] sm:$0xff]
    %v290 = vld [vmem:[#allocation2 + $0x58] sm:$0xff]
    %v291 = vld [vmem:[#allocation2 + $0x60] sm:$0xff]
    %v292 = vld [vmem:[#allocation2 + $0x68] sm:$0xff]
    %v293 = vld [vmem:[#allocation2 + $0x70] sm:$0xff]
    %v294 = vld [vmem:[#allocation2 + $0x78] sm:$0xff]
    %v295 = vld [vmem:[%s2] sm:$0x1]
    %v297 = vperm.slane %v295, 0
    %v299 = vadd.f32 %v279, %v297
    %v300 = vadd.f32 %v280, %v297
    %v301 = vadd.f32 %v281, %v297
    %v302 = vadd.f32 %v282, %v297
    %v303 = vadd.f32 %v283, %v297
    %v304 = vadd.f32 %v284, %v297
    %v305 = vadd.f32 %v285, %v297
    %v306 = vadd.f32 %v286, %v297
    %v307 = vadd.f32 %v287, %v297
    %v308 = vadd.f32 %v288, %v297
    %v309 = vadd.f32 %v289, %v297
    %v310 = vadd.f32 %v290, %v297
    %v311 = vadd.f32 %v291, %v297
    %v312 = vadd.f32 %v292, %v297
    %v313 = vadd.f32 %v293, %v297
    %v314 = vadd.f32 %v294, %v297
    %v315 = vlaneseq
    %v316 = vand.u32 %v315, 127
    %vm317 = vcmp.lt.s32.totalorder %v316, 64
    %318 = vadd.xlane.f32.xlu0 %v299
    %v319 = vpop.xlane.xlu0 %318
    %320 = vadd.xlane.f32.xlu0 %v300
    %v321 = vpop.xlane.xlu0 %320
    %322 = vadd.xlane.f32.xlu0 %v301
    %v323 = vpop.xlane.xlu0 %322
    %324 = vadd.xlane.f32.xlu0 %v302
    %v325 = vpop.xlane.xlu0 %324
    %326 = vadd.xlane.f32.xlu0 %v303
    %v327 = vpop.xlane.xlu0 %326
    %328 = vadd.xlane.f32.xlu0 %v304
    %v329 = vpop.xlane.xlu0 %328
    %330 = vadd.xlane.f32.xlu0 %v305
    %v331 = vpop.xlane.xlu0 %330
    %332 = vadd.xlane.f32.xlu0 %v306
    %v333 = vpop.xlane.xlu0 %332
    %334 = vadd.xlane.f32.xlu0 %v307
    %v335 = vpop.xlane.xlu0 %334
    %336 = vadd.xlane.f32.xlu0 %v308
    %v337 = vpop.xlane.xlu0 %336
    %338 = vadd.xlane.f32.xlu0 %v309
    %v339 = vpop.xlane.xlu0 %338
    %340 = vadd.xlane.f32.xlu0 %v310
    %v341 = vpop.xlane.xlu0 %340
    %342 = vadd.xlane.f32.xlu0 %v311
    %v343 = vpop.xlane.xlu0 %342
    %344 = vadd.xlane.f32.xlu0 %v312
    %v345 = vpop.xlane.xlu0 %344
    %346 = vadd.xlane.f32.xlu0 %v313
    %v347 = vpop.xlane.xlu0 %346
    %348 = vadd.xlane.f32.xlu0 %v314
    %v349 = vpop.xlane.xlu0 %348
    %v350 = vmul.f32 %v319, 0.015625
    %v351 = vmul.f32 %v321, 0.015625
    %v352 = vmul.f32 %v323, 0.015625
    %v353 = vmul.f32 %v325, 0.015625
    %v354 = vmul.f32 %v327, 0.015625
    %v355 = vmul.f32 %v329, 0.015625
    %v356 = vmul.f32 %v331, 0.015625
    %v357 = vmul.f32 %v333, 0.015625
    %v358 = vmul.f32 %v335, 0.015625
    %v359 = vmul.f32 %v337, 0.015625
    %v360 = vmul.f32 %v339, 0.015625
    %v361 = vmul.f32 %v341, 0.015625
    %v362 = vmul.f32 %v343, 0.015625
    %v363 = vmul.f32 %v345, 0.015625
    %v364 = vmul.f32 %v347, 0.015625
    %v365 = vmul.f32 %v349, 0.015625
    %v366 = vsub.f32 %v299, %v350
    %v367 = vsub.f32 %v300, %v351
    %v368 = vsub.f32 %v301, %v352
    %v369 = vsub.f32 %v302, %v353
    %v370 = vsub.f32 %v303, %v354
    %v371 = vsub.f32 %v304, %v355
    %v372 = vsub.f32 %v305, %v356
    %v373 = vsub.f32 %v306, %v357
    %v374 = vsub.f32 %v307, %v358
    %v375 = vsub.f32 %v308, %v359
    %v376 = vsub.f32 %v309, %v360
    %v377 = vsub.f32 %v310, %v361
    %v378 = vsub.f32 %v311, %v362
    %v379 = vsub.f32 %v312, %v363
    %v380 = vsub.f32 %v313, %v364
    %v381 = vsub.f32 %v314, %v365
    %v382 = vsel %vm317, %v366, 0.0
    %v383 = vsel %vm317, %v367, 0.0
    %v384 = vsel %vm317, %v368, 0.0
    %v385 = vsel %vm317, %v369, 0.0
    %v386 = vsel %vm317, %v370, 0.0
    %v387 = vsel %vm317, %v371, 0.0
    %v388 = vsel %vm317, %v372, 0.0
    %v389 = vsel %vm317, %v373, 0.0
    %v390 = vsel %vm317, %v374, 0.0
    %v391 = vsel %vm317, %v375, 0.0
    %v392 = vsel %vm317, %v376, 0.0
    %v393 = vsel %vm317, %v377, 0.0
    %v394 = vsel %vm317, %v378, 0.0
    %v395 = vsel %vm317, %v379, 0.0
    %v396 = vsel %vm317, %v380, 0.0
    %v397 = vsel %vm317, %v381, 0.0
    %v398 = vmul.f32 %v382, %v382
    %v399 = vmul.f32 %v383, %v383
    %v400 = vmul.f32 %v384, %v384
    %v401 = vmul.f32 %v385, %v385
    %v402 = vmul.f32 %v386, %v386
    %v403 = vmul.f32 %v387, %v387
    %v404 = vmul.f32 %v388, %v388
    %v405 = vmul.f32 %v389, %v389
    %v406 = vmul.f32 %v390, %v390
    %v407 = vmul.f32 %v391, %v391
    %v408 = vmul.f32 %v392, %v392
    %v409 = vmul.f32 %v393, %v393
    %v410 = vmul.f32 %v394, %v394
    %v411 = vmul.f32 %v395, %v395
    %v412 = vmul.f32 %v396, %v396
    %v413 = vmul.f32 %v397, %v397
    %414 = vadd.xlane.f32.xlu0 %v398
    %v415 = vpop.xlane.xlu0 %414
    %416 = vadd.xlane.f32.xlu0 %v399
    %v417 = vpop.xlane.xlu0 %416
    %418 = vadd.xlane.f32.xlu0 %v400
    %v419 = vpop.xlane.xlu0 %418
    %420 = vadd.xlane.f32.xlu0 %v401
    %v421 = vpop.xlane.xlu0 %420
    %422 = vadd.xlane.f32.xlu0 %v402
    %v423 = vpop.xlane.xlu0 %422
    %424 = vadd.xlane.f32.xlu0 %v403
    %v425 = vpop.xlane.xlu0 %424
    %426 = vadd.xlane.f32.xlu0 %v404
    %v427 = vpop.xlane.xlu0 %426
    %428 = vadd.xlane.f32.xlu0 %v405
    %v429 = vpop.xlane.xlu0 %428
    %430 = vadd.xlane.f32.xlu0 %v406
    %v431 = vpop.xlane.xlu0 %430
    %432 = vadd.xlane.f32.xlu0 %v407
    %v433 = vpop.xlane.xlu0 %432
    %434 = vadd.xlane.f32.xlu0 %v408
    %v435 = vpop.xlane.xlu0 %434
    %436 = vadd.xlane.f32.xlu0 %v409
    %v437 = vpop.xlane.xlu0 %436
    %438 = vadd.xlane.f32.xlu0 %v410
    %v439 = vpop.xlane.xlu0 %438
    %440 = vadd.xlane.f32.xlu0 %v411
    %v441 = vpop.xlane.xlu0 %440
    %442 = vadd.xlane.f32.xlu0 %v412
    %v443 = vpop.xlane.xlu0 %442
    %444 = vadd.xlane.f32.xlu0 %v413
    %v445 = vpop.xlane.xlu0 %444
    %v446 = vmul.f32 %v415, 0.015625
    %v447 = vmul.f32 %v417, 0.015625
    %v448 = vmul.f32 %v419, 0.015625
    %v449 = vmul.f32 %v421, 0.015625
    %v450 = vmul.f32 %v423, 0.015625
    %v451 = vmul.f32 %v425, 0.015625
    %v452 = vmul.f32 %v427, 0.015625
    %v453 = vmul.f32 %v429, 0.015625
    %v454 = vmul.f32 %v431, 0.015625
    %v455 = vmul.f32 %v433, 0.015625
    %v456 = vmul.f32 %v435, 0.015625
    %v457 = vmul.f32 %v437, 0.015625
    %v458 = vmul.f32 %v439, 0.015625
    %v459 = vmul.f32 %v441, 0.015625
    %v460 = vmul.f32 %v443, 0.015625
    %v461 = vmul.f32 %v445, 0.015625
    %v462 = vadd.f32 %v446, 1e-05
    %v463 = vadd.f32 %v447, 1e-05
    %v464 = vadd.f32 %v448, 1e-05
    %v465 = vadd.f32 %v449, 1e-05
    %v466 = vadd.f32 %v450, 1e-05
    %v467 = vadd.f32 %v451, 1e-05
    %v468 = vadd.f32 %v452, 1e-05
    %v469 = vadd.f32 %v453, 1e-05
    %v470 = vadd.f32 %v454, 1e-05
    %v471 = vadd.f32 %v455, 1e-05
    %v472 = vadd.f32 %v456, 1e-05
    %v473 = vadd.f32 %v457, 1e-05
    %v474 = vadd.f32 %v458, 1e-05
    %v475 = vadd.f32 %v459, 1e-05
    %v476 = vadd.f32 %v460, 1e-05
    %v477 = vadd.f32 %v461, 1e-05
    %v478 = vrsqrt.pop %v462
    %v479 = vmul.f32 %v478, %v462
    %v480 = vmul.f32 %v479, %v478
    %v481 = vmul.f32 0.5, %v480
    %v482 = vsub.f32 1.5, %v481
    %v483 = vmul.f32 %v478, %v482
    %vm484 = vweird.f32 %v462
    %vm485 = vweird.f32 %v478
    %vm486 = vmor %vm484, %vm485
    %v487 = vsel %vm486, %v478, %v483
    %v488 = vrsqrt.pop %v463
    %v489 = vmul.f32 %v488, %v463
    %v490 = vmul.f32 %v489, %v488
    %v491 = vmul.f32 0.5, %v490
    %v492 = vsub.f32 1.5, %v491
    %v493 = vmul.f32 %v488, %v492
    %vm494 = vweird.f32 %v463
    %vm495 = vweird.f32 %v488
    %vm496 = vmor %vm494, %vm495
    %v497 = vsel %vm496, %v488, %v493
    %v498 = vrsqrt.pop %v464
    %v499 = vmul.f32 %v498, %v464
    %v500 = vmul.f32 %v499, %v498
    %v501 = vmul.f32 0.5, %v500
    %v502 = vsub.f32 1.5, %v501
    %v503 = vmul.f32 %v498, %v502
    %vm504 = vweird.f32 %v464
    %vm505 = vweird.f32 %v498
    %vm506 = vmor %vm504, %vm505
    %v507 = vsel %vm506, %v498, %v503
    %v508 = vrsqrt.pop %v465
    %v509 = vmul.f32 %v508, %v465
    %v510 = vmul.f32 %v509, %v508
    %v511 = vmul.f32 0.5, %v510
    %v512 = vsub.f32 1.5, %v511
    %v513 = vmul.f32 %v508, %v512
    %vm514 = vweird.f32 %v465
    %vm515 = vweird.f32 %v508
    %vm516 = vmor %vm514, %vm515
    %v517 = vsel %vm516, %v508, %v513
    %v518 = vrsqrt.pop %v466
    %v519 = vmul.f32 %v518, %v466
    %v520 = vmul.f32 %v519, %v518
    %v521 = vmul.f32 0.5, %v520
    %v522 = vsub.f32 1.5, %v521
    %v523 = vmul.f32 %v518, %v522
    %vm524 = vweird.f32 %v466
    %vm525 = vweird.f32 %v518
    %vm526 = vmor %vm524, %vm525
    %v527 = vsel %vm526, %v518, %v523
    %v528 = vrsqrt.pop %v467
    %v529 = vmul.f32 %v528, %v467
    %v530 = vmul.f32 %v529, %v528
    %v531 = vmul.f32 0.5, %v530
    %v532 = vsub.f32 1.5, %v531
    %v533 = vmul.f32 %v528, %v532
    %vm534 = vweird.f32 %v467
    %vm535 = vweird.f32 %v528
    %vm536 = vmor %vm534, %vm535
    %v537 = vsel %vm536, %v528, %v533
    %v538 = vrsqrt.pop %v468
    %v539 = vmul.f32 %v538, %v468
    %v540 = vmul.f32 %v539, %v538
    %v541 = vmul.f32 0.5, %v540
    %v542 = vsub.f32 1.5, %v541
    %v543 = vmul.f32 %v538, %v542
    %vm544 = vweird.f32 %v468
    %vm545 = vweird.f32 %v538
    %vm546 = vmor %vm544, %vm545
    %v547 = vsel %vm546, %v538, %v543
    %v548 = vrsqrt.pop %v469
    %v549 = vmul.f32 %v548, %v469
    %v550 = vmul.f32 %v549, %v548
    %v551 = vmul.f32 0.5, %v550
    %v552 = vsub.f32 1.5, %v551
    %v553 = vmul.f32 %v548, %v552
    %vm554 = vweird.f32 %v469
    %vm555 = vweird.f32 %v548
    %vm556 = vmor %vm554, %vm555
    %v557 = vsel %vm556, %v548, %v553
    %v558 = vrsqrt.pop %v470
    %v559 = vmul.f32 %v558, %v470
    %v560 = vmul.f32 %v559, %v558
    %v561 = vmul.f32 0.5, %v560
    %v562 = vsub.f32 1.5, %v561
    %v563 = vmul.f32 %v558, %v562
    %vm564 = vweird.f32 %v470
    %vm565 = vweird.f32 %v558
    %vm566 = vmor %vm564, %vm565
    %v567 = vsel %vm566, %v558, %v563
    %v568 = vrsqrt.pop %v471
    %v569 = vmul.f32 %v568, %v471
    %v570 = vmul.f32 %v569, %v568
    %v571 = vmul.f32 0.5, %v570
    %v572 = vsub.f32 1.5, %v571
    %v573 = vmul.f32 %v568, %v572
    %vm574 = vweird.f32 %v471
    %vm575 = vweird.f32 %v568
    %vm576 = vmor %vm574, %vm575
    %v577 = vsel %vm576, %v568, %v573
    %v578 = vrsqrt.pop %v472
    %v579 = vmul.f32 %v578, %v472
    %v580 = vmul.f32 %v579, %v578
    %v581 = vmul.f32 0.5, %v580
    %v582 = vsub.f32 1.5, %v581
    %v583 = vmul.f32 %v578, %v582
    %vm584 = vweird.f32 %v472
    %vm585 = vweird.f32 %v578
    %vm586 = vmor %vm584, %vm585
    %v587 = vsel %vm586, %v578, %v583
    %v588 = vrsqrt.pop %v473
    %v589 = vmul.f32 %v588, %v473
    %v590 = vmul.f32 %v589, %v588
    %v591 = vmul.f32 0.5, %v590
    %v592 = vsub.f32 1.5, %v591
    %v593 = vmul.f32 %v588, %v592
    %vm594 = vweird.f32 %v473
    %vm595 = vweird.f32 %v588
    %vm596 = vmor %vm594, %vm595
    %v597 = vsel %vm596, %v588, %v593
    %v598 = vrsqrt.pop %v474
    %v599 = vmul.f32 %v598, %v474
    %v600 = vmul.f32 %v599, %v598
    %v601 = vmul.f32 0.5, %v600
    %v602 = vsub.f32 1.5, %v601
    %v603 = vmul.f32 %v598, %v602
    %vm604 = vweird.f32 %v474
    %vm605 = vweird.f32 %v598
    %vm606 = vmor %vm604, %vm605
    %v607 = vsel %vm606, %v598, %v603
    %v608 = vrsqrt.pop %v475
    %v609 = vmul.f32 %v608, %v475
    %v610 = vmul.f32 %v609, %v608
    %v611 = vmul.f32 0.5, %v610
    %v612 = vsub.f32 1.5, %v611
    %v613 = vmul.f32 %v608, %v612
    %vm614 = vweird.f32 %v475
    %vm615 = vweird.f32 %v608
    %vm616 = vmor %vm614, %vm615
    %v617 = vsel %vm616, %v608, %v613
    %v618 = vrsqrt.pop %v476
    %v619 = vmul.f32 %v618, %v476
    %v620 = vmul.f32 %v619, %v618
    %v621 = vmul.f32 0.5, %v620
    %v622 = vsub.f32 1.5, %v621
    %v623 = vmul.f32 %v618, %v622
    %vm624 = vweird.f32 %v476
    %vm625 = vweird.f32 %v618
    %vm626 = vmor %vm624, %vm625
    %v627 = vsel %vm626, %v618, %v623
    %v628 = vrsqrt.pop %v477
    %v629 = vmul.f32 %v628, %v477
    %v630 = vmul.f32 %v629, %v628
    %v631 = vmul.f32 0.5, %v630
    %v632 = vsub.f32 1.5, %v631
    %v633 = vmul.f32 %v628, %v632
    %vm634 = vweird.f32 %v477
    %vm635 = vweird.f32 %v628
    %vm636 = vmor %vm634, %vm635
    %v637 = vsel %vm636, %v628, %v633
    %v638 = vmul.f32 %v382, %v487
    %v639 = vmul.f32 %v383, %v497
    %v640 = vmul.f32 %v384, %v507
    %v641 = vmul.f32 %v385, %v517
    %v642 = vmul.f32 %v386, %v527
    %v643 = vmul.f32 %v387, %v537
    %v644 = vmul.f32 %v388, %v547
    %v645 = vmul.f32 %v389, %v557
    %v646 = vmul.f32 %v390, %v567
    %v647 = vmul.f32 %v391, %v577
    %v648 = vmul.f32 %v392, %v587
    %v649 = vmul.f32 %v393, %v597
    %v650 = vmul.f32 %v394, %v607
    %v651 = vmul.f32 %v395, %v617
    %v652 = vmul.f32 %v396, %v627
    %v653 = vmul.f32 %v397, %v637
    %v654 = vld [vmem:[%s3] sm:$0x1]
    %v656 = vperm.slane %v654, 0
    %v658 = vmul.f32 %v638, %v656
    %v659 = vmul.f32 %v639, %v656
    %v660 = vmul.f32 %v640, %v656
    %v661 = vmul.f32 %v641, %v656
    %v662 = vmul.f32 %v642, %v656
    %v663 = vmul.f32 %v643, %v656
    %v664 = vmul.f32 %v644, %v656
    %v665 = vmul.f32 %v645, %v656
    %v666 = vmul.f32 %v646, %v656
    %v667 = vmul.f32 %v647, %v656
    %v668 = vmul.f32 %v648, %v656
    %v669 = vmul.f32 %v649, %v656
    %v670 = vmul.f32 %v650, %v656
    %v671 = vmul.f32 %v651, %v656
    %v672 = vmul.f32 %v652, %v656
    %v673 = vmul.f32 %v653, %v656
    %v674 = vld [vmem:[%s4] sm:$0x1]
    %v676 = vperm.slane %v674, 0
    %v678 = vadd.f32 %v658, %v676
    %v679 = vadd.f32 %v659, %v676
    %v680 = vadd.f32 %v660, %v676
    %v681 = vadd.f32 %v661, %v676
    %v682 = vadd.f32 %v662, %v676
    %v683 = vadd.f32 %v663, %v676
    %v684 = vadd.f32 %v664, %v676
    %v685 = vadd.f32 %v665, %v676
    %v686 = vadd.f32 %v666, %v676
    %v687 = vadd.f32 %v667, %v676
    %v688 = vadd.f32 %v668, %v676
    %v689 = vadd.f32 %v669, %v676
    %v690 = vadd.f32 %v670, %v676
    %v691 = vadd.f32 %v671, %v676
    %v692 = vadd.f32 %v672, %v676
    %v693 = vadd.f32 %v673, %v676
    %vm694 = vcmp.gt.f32.partialorder %v678, 0.0
    %vm695 = vcmp.gt.f32.partialorder %v679, 0.0
    %vm696 = vcmp.gt.f32.partialorder %v680, 0.0
    %vm697 = vcmp.gt.f32.partialorder %v681, 0.0
    %vm698 = vcmp.gt.f32.partialorder %v682, 0.0
    %vm699 = vcmp.gt.f32.partialorder %v683, 0.0
    %vm700 = vcmp.gt.f32.partialorder %v684, 0.0
    %vm701 = vcmp.gt.f32.partialorder %v685, 0.0
    %vm702 = vcmp.gt.f32.partialorder %v686, 0.0
    %vm703 = vcmp.gt.f32.partialorder %v687, 0.0
    %vm704 = vcmp.gt.f32.partialorder %v688, 0.0
    %vm705 = vcmp.gt.f32.partialorder %v689, 0.0
    %vm706 = vcmp.gt.f32.partialorder %v690, 0.0
    %vm707 = vcmp.gt.f32.partialorder %v691, 0.0
    %vm708 = vcmp.gt.f32.partialorder %v692, 0.0
    %vm709 = vcmp.gt.f32.partialorder %v693, 0.0
    %v710 = vmul.f32 %v678, 0.01
    %v711 = vmul.f32 %v679, 0.01
    %v712 = vmul.f32 %v680, 0.01
    %v713 = vmul.f32 %v681, 0.01
    %v714 = vmul.f32 %v682, 0.01
    %v715 = vmul.f32 %v683, 0.01
    %v716 = vmul.f32 %v684, 0.01
    %v717 = vmul.f32 %v685, 0.01
    %v718 = vmul.f32 %v686, 0.01
    %v719 = vmul.f32 %v687, 0.01
    %v720 = vmul.f32 %v688, 0.01
    %v721 = vmul.f32 %v689, 0.01
    %v722 = vmul.f32 %v690, 0.01
    %v723 = vmul.f32 %v691, 0.01
    %v724 = vmul.f32 %v692, 0.01
    %v725 = vmul.f32 %v693, 0.01
    %v726 = vsel %vm694, %v678, %v710
    %v727 = vsel %vm695, %v679, %v711
    %v728 = vsel %vm696, %v680, %v712
    %v729 = vsel %vm697, %v681, %v713
    %v730 = vsel %vm698, %v682, %v714
    %v731 = vsel %vm699, %v683, %v715
    %v732 = vsel %vm700, %v684, %v716
    %v733 = vsel %vm701, %v685, %v717
    %v734 = vsel %vm702, %v686, %v718
    %v735 = vsel %vm703, %v687, %v719
    %v736 = vsel %vm704, %v688, %v720
    %v737 = vsel %vm705, %v689, %v721
    %v738 = vsel %vm706, %v690, %v722
    %v739 = vsel %vm707, %v691, %v723
    %v740 = vsel %vm708, %v692, %v724
    %v741 = vsel %vm709, %v693, %v725
    %v742 = vpack.c.bf16 %v727, %v726
    %v743 = vpack.c.bf16 %v729, %v728
    %v744 = vpack.c.bf16 %v731, %v730
    %v745 = vpack.c.bf16 %v733, %v732
    %v746 = vpack.c.bf16 %v735, %v734
    %v747 = vpack.c.bf16 %v737, %v736
    %v748 = vpack.c.bf16 %v739, %v738
    %v749 = vpack.c.bf16 %v741, %v740
    %v750 = vld [vmem:[%s5] sm:$0xf]
    %v751 = vld [vmem:[%s5 + $0x4] sm:$0xf]
    %v752 = vld [vmem:[%s5 + $0x8] sm:$0xf]
    %v753 = vld [vmem:[%s5 + $0xc] sm:$0xf]
    %v754 = vld [vmem:[%s5 + $0x10] sm:$0xf]
    %v755 = vld [vmem:[%s5 + $0x14] sm:$0xf]
    %v756 = vld [vmem:[%s5 + $0x18] sm:$0xf]
    %v757 = vld [vmem:[%s5 + $0x1c] sm:$0xf]
    %v758 = vld [vmem:[%s5 + $0x20] sm:$0xf]
    %v759 = vld [vmem:[%s5 + $0x24] sm:$0xf]
    %v760 = vld [vmem:[%s5 + $0x28] sm:$0xf]
    %v761 = vld [vmem:[%s5 + $0x2c] sm:$0xf]
    %v762 = vld [vmem:[%s5 + $0x30] sm:$0xf]
    %v763 = vld [vmem:[%s5 + $0x34] sm:$0xf]
    %v764 = vld [vmem:[%s5 + $0x38] sm:$0xf]
    %v765 = vld [vmem:[%s5 + $0x3c] sm:$0xf]
    %v766 = vld [vmem:[%s6] sm:$0x1]
    %v768 = vperm.slane %v766, 0
    %v786 = vunpack.c.l.b16 %v750
    %v787 = vunpack.c.l.b16 %v751
    %v788 = vunpack.c.l.b16 %v752
    %v789 = vunpack.c.l.b16 %v753
    %v790 = vunpack.c.l.b16 %v754
    %v791 = vunpack.c.l.b16 %v755
    %v792 = vunpack.c.l.b16 %v756
    %v793 = vunpack.c.l.b16 %v757
    %v794 = vunpack.c.l.b16 %v758
    %v795 = vunpack.c.l.b16 %v759
    %v796 = vunpack.c.l.b16 %v760
    %v797 = vunpack.c.l.b16 %v761
    %v798 = vunpack.c.l.b16 %v762
    %v799 = vunpack.c.l.b16 %v763
    %v800 = vunpack.c.l.b16 %v764
    %v801 = vunpack.c.l.b16 %v765
    %v802 = vpack.c.b16 %v787, %v786
    %v803 = vpack.c.b16 %v789, %v788
    %v804 = vpack.c.b16 %v791, %v790
    %v805 = vpack.c.b16 %v793, %v792
    %v806 = vpack.c.b16 %v795, %v794
    %v807 = vpack.c.b16 %v797, %v796
    %v808 = vpack.c.b16 %v799, %v798
    %v809 = vpack.c.b16 %v801, %v800
    %818 = vmatpush.bf16.msra.mxu0 %v809
    %819 = vmatpush.bf16.msra.mxu0 %v808
    %820 = vmatpush.bf16.msra.mxu0 %v807
    %821 = vmatpush.bf16.msra.mxu0 %v806
    %822 = vmatpush.bf16.msra.mxu0 %v805
    %823 = vmatpush.bf16.msra.mxu0 %v804
    %824 = vmatpush.bf16.msra.mxu0 %v803
    %825 = vmatpush.bf16.msra.mxu0 %v802
    %826 = vmatmul.bf16.gmra.mxu0 %v742
    %v827 = vpop.f32.mrf.mxu0
    %v828 = vadd.f32 %v768, %v827
    %v829 = vpop.f32.mrf.mxu0
    %v830 = vadd.f32 %v768, %v829
    %831 = vmatmul.bf16.gmra.mxu0 %v743
    %v832 = vpop.f32.mrf.mxu0
    %v833 = vadd.f32 %v768, %v832
    %v834 = vpop.f32.mrf.mxu0
    %v835 = vadd.f32 %v768, %v834
    %836 = vmatmul.bf16.gmra.mxu0 %v744
    %v837 = vpop.f32.mrf.mxu0
    %v838 = vadd.f32 %v768, %v837
    %v839 = vpop.f32.mrf.mxu0
    %v840 = vadd.f32 %v768, %v839
    %841 = vmatmul.bf16.gmra.mxu0 %v745
    %v842 = vpop.f32.mrf.mxu0
    %v843 = vadd.f32 %v768, %v842
    %v844 = vpop.f32.mrf.mxu0
    %v845 = vadd.f32 %v768, %v844
    %846 = vmatmul.bf16.gmra.mxu0 %v746
    %v847 = vpop.f32.mrf.mxu0
    %v848 = vadd.f32 %v768, %v847
    %v849 = vpop.f32.mrf.mxu0
    %v850 = vadd.f32 %v768, %v849
    %851 = vmatmul.bf16.gmra.mxu0 %v747
    %v852 = vpop.f32.mrf.mxu0
    %v853 = vadd.f32 %v768, %v852
    %v854 = vpop.f32.mrf.mxu0
    %v855 = vadd.f32 %v768, %v854
    %856 = vmatmul.bf16.gmra.mxu0 %v748
    %v857 = vpop.f32.mrf.mxu0
    %v858 = vadd.f32 %v768, %v857
    %v859 = vpop.f32.mrf.mxu0
    %v860 = vadd.f32 %v768, %v859
    %861 = vmatmul.bf16.gmra.mxu0 %v749
    %v862 = vpop.f32.mrf.mxu0
    %v863 = vadd.f32 %v768, %v862
    %v864 = vpop.f32.mrf.mxu0
    %v865 = vadd.f32 %v768, %v864
    %866 = vdwg.mxu0
    %867 = vst [vmem:[%s7] sm:$0xff] %v828
    %868 = vst [vmem:[%s7 + $0x8] sm:$0xff] %v830
    %869 = vst [vmem:[%s7 + $0x10] sm:$0xff] %v833
    %870 = vst [vmem:[%s7 + $0x18] sm:$0xff] %v835
    %871 = vst [vmem:[%s7 + $0x20] sm:$0xff] %v838
    %872 = vst [vmem:[%s7 + $0x28] sm:$0xff] %v840
    %873 = vst [vmem:[%s7 + $0x30] sm:$0xff] %v843
    %874 = vst [vmem:[%s7 + $0x38] sm:$0xff] %v845
    %875 = vst [vmem:[%s7 + $0x40] sm:$0xff] %v848
    %876 = vst [vmem:[%s7 + $0x48] sm:$0xff] %v850
    %877 = vst [vmem:[%s7 + $0x50] sm:$0xff] %v853
    %878 = vst [vmem:[%s7 + $0x58] sm:$0xff] %v855
    %879 = vst [vmem:[%s7 + $0x60] sm:$0xff] %v858
    %880 = vst [vmem:[%s7 + $0x68] sm:$0xff] %v860
    %881 = vst [vmem:[%s7 + $0x70] sm:$0xff] %v863
    %882 = vst [vmem:[%s7 + $0x78] sm:$0xff] %v865
  $region37: #{gcn_layer.5} parent=0 // pred_fallthru
    _
  // Predicated region
  $region38: #{gcn_layer.5} parent=0 // pred_check
    _
  $region39: #{gcn_layer.5} parent=0 // pred_check_branch
    %884 = sbr.rel (0) target = $region41
  $region40: #{gcn_layer.5} parent=0 // pred_region
    _
  $region41: #{gcn_layer.5} parent=0 // pred_fallthru
    _
  // Predicated region
  $region42: #{gcn_layer.5} parent=0 // pred_check
    _
  $region43: #{gcn_layer.5} parent=0 // pred_check_branch
    %886 = sbr.rel (0) target = $region45
  $region44: #{gcn_layer.5} parent=0 // pred_region
    _
  $region45: #{gcn_layer.5} parent=0 // pred_fallthru
    _

</llo_original>
